<compile_context>
chip_gen: v7x
topology: tpu7x:2x2x1
jax: 0.10.0
libtpu: 0.0.40
codegen_flags: <defaults>
</compile_context>

<pallas_src>
import math
import functools

import jax
import jax.numpy as jnp
from jax.experimental import pallas as pl
from jax.experimental.pallas import tpu as pltpu


def _conv2d_kernel(xp_ref, w_ref, b_ref, o_ref, *,
                   kh, kw, sh, sw, toh, ow, tih):
    """One (batch, output-row-tile) grid step of the convolution.

    xp_ref : (Cin, Hp, Wp)        padded input image of this batch element
    w_ref  : (Cout, KH*KW*Cin)    lane-dense flattened weight (tap-major)
    b_ref  : (Cout, 1)            bias column (f32)
    o_ref  : (Cout, TOH*OW)       lane-dense flattened output row tile
    """
    cin = xp_ref.shape[0]
    t = pl.program_id(1)

    # First padded-input row needed by this output row tile.
    row0 = t * (toh * sh)
    if (toh * sh) % 8 == 0:
        row0 = pl.multiple_of(row0, 8)

    # Halo'd row window for this tile: (Cin, TIH, Wp).
    xt = xp_ref[:, pl.ds(row0, tih), :]

    # im2col slab, rows ordered (kh, kw, cin) to match the flattened weight.
    taps = []
    for i in range(kh):
        for j in range(kw):
            if sh == 1 and sw == 1:
                p = jax.lax.slice(xt, (0, i, j), (cin, i + toh, j + ow))
            else:
                # TODO(synk): lane-strided slice (sw > 1) costs XLU gathers;
                # pre-striding in the wrapper would make it free DMA plumbing.
                p = jax.lax.slice(
                    xt, (0, i, j),
                    (cin, i + (toh - 1) * sh + 1, j + (ow - 1) * sw + 1),
                    (1, sh, sw))
            taps.append(p)                                  # (Cin, TOH, OW)
    slab = jnp.concatenate(taps, axis=0).reshape(kh * kw * cin, toh * ow)

    # Single fused MXU matmul with f32 accumulation, then bias broadcast.
    acc = jnp.dot(w_ref[...], slab, preferred_element_type=jnp.float32)
    acc = acc + b_ref[...].astype(jnp.float32)              # (Cout, 1) bcast
    o_ref[...] = acc.astype(o_ref.dtype)                    # unmasked vst


def _choose_tile_oh(oh, ow, max_tile_elems=64 * 1024):
    """Largest divisor of `oh` whose flattened output tile is lane-dense
    (multiple of 128) and small enough to keep VMEM bounded. Falls back to
    the full extent (always a legal block)."""
    best = oh
    for d in range(1, oh + 1):
        if oh % d:
            continue
        lanes = d * ow
        if lanes % 128 == 0 and lanes <= max_tile_elems:
            best = d
    return best


def convnd_forward(x, weight, bias, *, stride=(1, 1), padding=(1, 1),
                   dilation=(1, 1), groups=1, compute_dtype=None):
    """ConvNd.forward for num_dims=2 (native nn.Conv2d path), zeros padding.

    compute_dtype: optionally jnp.bfloat16 to halve HBM/VMEM traffic on
    v6e / v7x (accumulation stays f32); default keeps the input dtype.
    """
    assert tuple(dilation) == (1, 1) and groups == 1, \
        "Only dilation=1, groups=1 implemented."
    n, cin, h, w_sp = x.shape
    cout, cin_w, kh, kw = weight.shape
    assert cin_w == cin
    sh, sw = stride
    ph, pw = padding

    oh = (h + 2 * ph - kh) // sh + 1
    ow = (w_sp + 2 * pw - kw) // sw + 1
    out_dtype = x.dtype

    # ---- host-side layout plumbing (cheap, outside the kernel) -------------
    xp = jnp.pad(x, ((0, 0), (0, 0), (ph, ph), (pw, pw)))   # padding_mode='zeros'
    hp, wp = h + 2 * ph, w_sp + 2 * pw
    # Lane-dense flattened weight (Cout, KH*KW*Cin), tap-major to match slab.
    w_flat = jnp.transpose(weight, (0, 2, 3, 1)).reshape(cout, kh * kw * cin)
    b_col = bias.reshape(cout, 1).astype(jnp.float32)
    if compute_dtype is not None:                           # bf16 on v6e/v7x
        xp = xp.astype(compute_dtype)
        w_flat = w_flat.astype(compute_dtype)

    toh = _choose_tile_oh(oh, ow)
    n_t = oh // toh
    tih = (toh - 1) * sh + kh                               # halo'd rows/tile

    kernel = functools.partial(
        _conv2d_kernel, kh=kh, kw=kw, sh=sh, sw=sw, toh=toh, ow=ow, tih=tih)

    # VMEM budget (double-buffered input image + output tile + weights),
    # clamped so it stays legal on v7x's 64 MiB physical VMEM.
    itemsize_in = jnp.dtype(xp.dtype).itemsize
    itemsize_out = jnp.dtype(out_dtype).itemsize
    in_blk_bytes = cin * hp * wp * itemsize_in
    out_blk_bytes = cout * toh * ow * itemsize_out
    w_bytes = cout * kh * kw * cin * jnp.dtype(w_flat.dtype).itemsize
    vmem_limit = int(min(
        max(3 * (in_blk_bytes + out_blk_bytes) + 4 * w_bytes + (1 << 20),
            32 * 1024 * 1024),
        56 * 1024 * 1024))

    cost = pl.CostEstimate(
        flops=2 * n * oh * ow * cout * cin * kh * kw,
        transcendentals=0,
        bytes_accessed=int(n * cin * hp * wp * itemsize_in
                           + w_bytes + cout * 4
                           + n * cout * oh * ow * itemsize_out))

    y_flat = pl.pallas_call(
        kernel,
        out_shape=jax.ShapeDtypeStruct((n, cout, oh * ow), out_dtype),
        grid=(n, n_t),
        in_specs=[
            # Whole padded image of one batch element stays VMEM-resident
            # across the row-tile axis (same block index for every t).
            pl.BlockSpec((None, cin, hp, wp), lambda b, t: (b, 0, 0, 0)),
            pl.BlockSpec((cout, kh * kw * cin), lambda b, t: (0, 0)),
            pl.BlockSpec((cout, 1), lambda b, t: (0, 0)),
        ],
        out_specs=pl.BlockSpec((None, cout, toh * ow), lambda b, t: (b, 0, t)),
        compiler_params=pltpu.CompilerParams(
            dimension_semantics=("parallel", "parallel"),
            vmem_limit_bytes=vmem_limit),
        cost_estimate=cost,
    )(xp, w_flat, b_col)

    return y_flat.reshape(n, cout, oh, ow)


if __name__ == "__main__":
    # Module config: ConvNd(in_channels=4, out_channels=8, num_dims=2,
    #                       kernel_size=3, stride=1, padding=1, use_bias=True)
    N, CIN, H, W = 2, 4, 16, 16
    COUT, K = 8, 3
    STRIDE = (1, 1)
    PADDING = (1, 1)

    key = jax.random.PRNGKey(0)
    k_x, k_w, k_b = jax.random.split(key, 3)

    # Deterministic init matching the module's default kernel_initializer:
    # uniform(-k, k), k = 1 / sqrt(in_channels * prod(kernel_size)).
    k_bound = 1.0 / math.sqrt(CIN * K * K)
    x = jax.random.normal(k_x, (N, CIN, H, W), dtype=jnp.float32)
    weight = jax.random.uniform(k_w, (COUT, CIN, K, K), dtype=jnp.float32,
                                minval=-k_bound, maxval=k_bound)
    bias = jax.random.uniform(k_b, (COUT,), dtype=jnp.float32,
                              minval=-k_bound, maxval=k_bound)

    y = convnd_forward(x, weight, bias, stride=STRIDE, padding=PADDING)
    y = jax.block_until_ready(y)

    # Reference check against XLA's conv (same semantics as nn.Conv2d forward).
    y_ref = jax.lax.conv_general_dilated(
        x, weight, window_strides=STRIDE,
        padding=[(PADDING[0], PADDING[0]), (PADDING[1], PADDING[1])],
        dimension_numbers=("NCHW", "OIHW", "NCHW"),
        precision=jax.lax.Precision.HIGHEST,
    ) + bias.reshape(1, COUT, 1, 1)

    assert y.shape == (N, COUT, H, W)
    err = float(jnp.max(jnp.abs(y - y_ref)))
    assert jnp.allclose(y, y_ref, atol=1e-4, rtol=1e-4), err
    print("KERNEL_OK")
</pallas_src>

<mosaic_0001>
module attributes {stable_mosaic.version = 11 : i64} {
  func.func @_conv2d_kernel(%arg0: i32, %arg1: i32, %arg2: memref<1x4x18x18xf32, #tpu.memory_space<vmem>>, %arg3: memref<8x36xf32, #tpu.memory_space<vmem>>, %arg4: memref<8x1xf32, #tpu.memory_space<vmem>>, %arg5: memref<1x8x256xf32, #tpu.memory_space<vmem>>) attributes {dimension_semantics = [#tpu.dimension_semantics<parallel>, #tpu.dimension_semantics<parallel>], iteration_bounds = array<i64: 2, 1>, scalar_prefetch = 0 : i64, scratch_operands = 0 : i64, tpu.core_type = #tpu.core_type<tc>, window_params = [{transform_indices = @transform_0, window_bounds = array<i64: 1, 4, 18, 18>}, {pipeline_mode = #tpu.pipeline_mode<synchronous>, transform_indices = @transform_1, window_bounds = array<i64: 8, 36>}, {pipeline_mode = #tpu.pipeline_mode<synchronous>, transform_indices = @transform_2, window_bounds = array<i64: 8, 1>}, {transform_indices = @transform_3, window_bounds = array<i64: 1, 8, 256>}]} {
    %c16_i32 = arith.constant 16 : i32
    %0 = arith.muli %arg1, %c16_i32 : i32
    %1 = tpu.assume_multiple %0, 8 : i32
    %c0 = arith.constant 0 : index
    %c0_0 = arith.constant 0 : index
    %2 = arith.index_cast %1 : i32 to index
    %c0_1 = arith.constant 0 : index
    %3 = vector.load %arg2[%c0, %c0_0, %2, %c0_1] : memref<1x4x18x18xf32, #tpu.memory_space<vmem>>, vector<1x4x18x18xf32>
    %4 = vector.shape_cast %3 : vector<1x4x18x18xf32> to vector<4x18x18xf32>
    %5 = vector.extract_strided_slice %4 {offsets = [0, 0, 0], sizes = [4, 16, 16], strides = [1, 1, 1]} : vector<4x18x18xf32> to vector<4x16x16xf32>
    %6 = vector.extract_strided_slice %4 {offsets = [0, 0, 1], sizes = [4, 16, 16], strides = [1, 1, 1]} : vector<4x18x18xf32> to vector<4x16x16xf32>
    %7 = vector.extract_strided_slice %4 {offsets = [0, 0, 2], sizes = [4, 16, 16], strides = [1, 1, 1]} : vector<4x18x18xf32> to vector<4x16x16xf32>
    %8 = vector.extract_strided_slice %4 {offsets = [0, 1, 0], sizes = [4, 16, 16], strides = [1, 1, 1]} : vector<4x18x18xf32> to vector<4x16x16xf32>
    %9 = vector.extract_strided_slice %4 {offsets = [0, 1, 1], sizes = [4, 16, 16], strides = [1, 1, 1]} : vector<4x18x18xf32> to vector<4x16x16xf32>
    %10 = vector.extract_strided_slice %4 {offsets = [0, 1, 2], sizes = [4, 16, 16], strides = [1, 1, 1]} : vector<4x18x18xf32> to vector<4x16x16xf32>
    %11 = vector.extract_strided_slice %4 {offsets = [0, 2, 0], sizes = [4, 16, 16], strides = [1, 1, 1]} : vector<4x18x18xf32> to vector<4x16x16xf32>
    %12 = vector.extract_strided_slice %4 {offsets = [0, 2, 1], sizes = [4, 16, 16], strides = [1, 1, 1]} : vector<4x18x18xf32> to vector<4x16x16xf32>
    %13 = vector.extract_strided_slice %4 {offsets = [0, 2, 2], sizes = [4, 16, 16], strides = [1, 1, 1]} : vector<4x18x18xf32> to vector<4x16x16xf32>
    %14 = tpu.concatenate %5, %6, %7, %8, %9, %10, %11, %12, %13 in 0 : vector<4x16x16xf32>, vector<4x16x16xf32>, vector<4x16x16xf32>, vector<4x16x16xf32>, vector<4x16x16xf32>, vector<4x16x16xf32>, vector<4x16x16xf32>, vector<4x16x16xf32>, vector<4x16x16xf32> -> vector<36x16x16xf32>
    %15 = vector.shape_cast %14 : vector<36x16x16xf32> to vector<36x256xf32>
    %c0_2 = arith.constant 0 : index
    %c0_3 = arith.constant 0 : index
    %16 = vector.load %arg3[%c0_2, %c0_3] : memref<8x36xf32, #tpu.memory_space<vmem>>, vector<8x36xf32>
    %cst = arith.constant dense<0.000000e+00> : vector<8x256xf32>
    %17 = tpu.matmul %16, %15, %cst {dimension_numbers = #tpu.dot_dimension_numbers<[1], [0], [0], [1], [0, 0, 1, 1], [], []>} : vector<8x36xf32>, vector<36x256xf32>, vector<8x256xf32> -> vector<8x256xf32>
    %c0_4 = arith.constant 0 : index
    %c0_5 = arith.constant 0 : index
    %18 = vector.load %arg4[%c0_4, %c0_5] : memref<8x1xf32, #tpu.memory_space<vmem>>, vector<8x1xf32>
    %19 = vector.broadcast %18 : vector<8x1xf32> to vector<8x256xf32>
    %20 = arith.addf %17, %19 : vector<8x256xf32>
    %c0_6 = arith.constant 0 : index
    %c0_7 = arith.constant 0 : index
    %c0_8 = arith.constant 0 : index
    %21 = vector.load %arg5[%c0_6, %c0_7, %c0_8] : memref<1x8x256xf32, #tpu.memory_space<vmem>>, vector<1x8x256xf32>
    %22 = vector.shape_cast %21 : vector<1x8x256xf32> to vector<8x256xf32>
    %23 = vector.shape_cast %20 : vector<8x256xf32> to vector<1x8x256xf32>
    tpu.vector_store %arg5[%c0_6, %c0_7, %c0_8], %23 {strides = array<i32>} : memref<1x8x256xf32, #tpu.memory_space<vmem>>, vector<1x8x256xf32>,
    return
  }
  func.func @transform_0(%arg0: i32, %arg1: i32) -> (i32, i32, i32, i32) {
    %c0_i32 = arith.constant 0 : i32
    %c0_i32_0 = arith.constant 0 : i32
    %c0_i32_1 = arith.constant 0 : i32
    %c0_i32_2 = arith.constant 0 : i32
    return %arg0, %c0_i32, %c0_i32_0, %c0_i32_1 : i32, i32, i32, i32
  }
  func.func @transform_1(%arg0: i32, %arg1: i32) -> (i32, i32) {
    %c0_i32 = arith.constant 0 : i32
    %c0_i32_0 = arith.constant 0 : i32
    %c0_i32_1 = arith.constant 0 : i32
    return %c0_i32, %c0_i32_0 : i32, i32
  }
  func.func @transform_2(%arg0: i32, %arg1: i32) -> (i32, i32) {
    %c0_i32 = arith.constant 0 : i32
    %c0_i32_0 = arith.constant 0 : i32
    %c0_i32_1 = arith.constant 0 : i32
    return %c0_i32, %c0_i32_0 : i32, i32
  }
  func.func @transform_3(%arg0: i32, %arg1: i32) -> (i32, i32, i32) {
    %c0_i32 = arith.constant 0 : i32
    %c0_i32_0 = arith.constant 0 : i32
    return %arg0, %c0_i32, %arg1 : i32, i32, i32
  }
}

</mosaic_0001>

<llo_original>
// kernel: tpu_custom_call.1
$region0: #{tpu_custom_call.1}
  #allocation0 [shape = 'u32[]', space=smem, size = 0x4, offset = 0x4, fixed_abs, tag = 'smem constant byte address 0x4 - core index']
  #allocation1 [shape = 'u32[144,128]{1,0:T(1,128)}', space=vmem, size = 0x12000, scoped, tag = 'internal scratch']
  %s0 = inlined_call_operand.vmem [shape: f32[2,4,18,18], index: 0, kind: input, shape index: {}]
  %s1 = inlined_call_operand.vmem [shape: f32[8,36], index: 1, kind: input, shape index: {}]
  %s2 = inlined_call_operand.vmem [shape: f32[8,1], index: 2, kind: input, shape index: {}]
  %s3 = inlined_call_operand.hbm [shape: f32[2,8,256], index: 3, kind: output, shape index: {}]
  %s4 = sld [smem:[#allocation0]]
  $region45: #{tpu_custom_call.1} parent=0
    _
  %s6 = ssub.s32 1, %s4
  %s7 = scalar_select 0, %s6, %s4
  $region1: #{tpu_custom_call.1} parent=0
    #allocation2 [shape = 'u8[16384]{0}', space=vmem, size = 0x4000, scoped, tag = 'output window, operand 0']
    #allocation3 [shape = 's32[2]{0}', space=sflag, size = 0x8, scoped, tag = 'scoped memory for tpu_custom_call.1']
    %8 = vsyncpa [#allocation3], 0
    %s9 = scalar_lea.sflag [#allocation3], 1
    %10 = vsyncpa %s9, 0
    loop: start=0, step=1, limit=4
    $region2: #{tpu_custom_call.1} parent=1 // loop_pre_header
      _
    $region3: #{tpu_custom_call.1} parent=1 // loop_header
      %s12 = sphi 0, %s16
      %p13 = scmp.ge.s32.totalorder %s12, 4
      %s19 = sphi 0, %s31
      %s20 = sphi 0, %s27
      %s21 = sphi 0, %s19
      %s22 = sphi 0, %s20
      %s23 = sphi 0, %s21
      %s24 = sphi 0, %s22
      %s34 = sphi 0, %s36
      %s37 = sphi 0, %s34
      %s38 = sphi 0, %s37
      %s54 = sphi 0, %s38
      %s58 = sphi 0, %s58
      %s60 = sphi 0, %s58
      %s61 = sphi 0, %s60
      %s75 = sphi 0, %s61
      %s79 = sphi 0, %s79
      %s81 = sphi 0, %s79
      %s82 = sphi 0, %s81
      %s96 = sphi 0, %s82
      %s104 = sphi 0, %s106
      %s107 = sphi 0, %s104
      %s108 = sphi 0, %s107
      %s124 = sphi 0, %s108
    $region4: #{tpu_custom_call.1} parent=1 // loop_header_branch
      %15 = sbr.rel (%p13) target = $region8
    $region5: #{tpu_custom_call.1} parent=1 // loop_body
      %s17 = ssub.s32 %s12, 1
      %s18 = ssub.s32 %s12, 2
      %s25 = sadd.s32 1, %s20
      %p26 = scmp.ge.s32.totalorder %s25, 1
      %s27 = scalar_select %p26, 0, %s25
      %s28 = sadd.s32 1, %s19
      %s29 = scalar_select %p26, %s28, %s19
      %p30 = scmp.ge.s32.totalorder %s29, 2
      %s31 = scalar_select %p30, 0, %s29
      %s32 = ssub.s32 %s19, %s31
      %p33 = scmp.eq.s32.totalorder %s32, 0
      %s35 = sadd.s32 %s34, 1
      %s36 = scalar_select %p33, %s34, %s35
      %p39 = pneg %p33
      %p40 = scmp.eq.s32.totalorder %s12, 1
      %p41 = por %p39, %p40
      %p42 = scmp.ne.s32.totalorder %s34, %s37
      %p43 = scmp.eq.s32.totalorder %s12, 0
      %p44 = por %p42, %p43
      %p45 = scmp.ne.s32.totalorder %s34, %s37
      %p46 = scmp.eq.s32.totalorder %s17, 1
      %p47 = por %p45, %p46
      %p48 = scmp.ne.s32.totalorder %s37, %s38
      %p49 = scmp.eq.s32.totalorder %s17, 0
      %p50 = por %p48, %p49
      %p51 = scmp.ne.s32.totalorder %s37, %s38
      %p52 = scmp.eq.s32.totalorder %s18, 1
      %p53 = por %p51, %p52
      %p55 = scmp.ne.s32.totalorder %s38, %s54
      %p56 = scmp.eq.s32.totalorder %s18, 0
      %p57 = por %p55, %p56
      %s59 = sadd.s32 %s58, 1
      %p62 = scmp.eq.s32.totalorder %s12, 1
      %p63 = scmp.ne.s32.totalorder %s58, %s60
      %p64 = scmp.eq.s32.totalorder %s12, 0
      %p65 = por %p63, %p64
      %p66 = scmp.ne.s32.totalorder %s58, %s60
      %p67 = scmp.eq.s32.totalorder %s17, 1
      %p68 = por %p66, %p67
      %p69 = scmp.ne.s32.totalorder %s60, %s61
      %p70 = scmp.eq.s32.totalorder %s17, 0
      %p71 = por %p69, %p70
      %p72 = scmp.ne.s32.totalorder %s60, %s61
      %p73 = scmp.eq.s32.totalorder %s18, 1
      %p74 = por %p72, %p73
      %p76 = scmp.ne.s32.totalorder %s61, %s75
      %p77 = scmp.eq.s32.totalorder %s18, 0
      %p78 = por %p76, %p77
      %s80 = sadd.s32 %s79, 1
      %p83 = scmp.eq.s32.totalorder %s12, 1
      %p84 = scmp.ne.s32.totalorder %s79, %s81
      %p85 = scmp.eq.s32.totalorder %s12, 0
      %p86 = por %p84, %p85
      %p87 = scmp.ne.s32.totalorder %s79, %s81
      %p88 = scmp.eq.s32.totalorder %s17, 1
      %p89 = por %p87, %p88
      %p90 = scmp.ne.s32.totalorder %s81, %s82
      %p91 = scmp.eq.s32.totalorder %s17, 0
      %p92 = por %p90, %p91
      %p93 = scmp.ne.s32.totalorder %s81, %s82
      %p94 = scmp.eq.s32.totalorder %s18, 1
      %p95 = por %p93, %p94
      %p97 = scmp.ne.s32.totalorder %s82, %s96
      %p98 = scmp.eq.s32.totalorder %s18, 0
      %p99 = por %p97, %p98
      %s100 = ssub.s32 %s19, %s31
      %s101 = ssub.s32 %s20, %s27
      %s102 = sor.u32 %s100, %s101
      %p103 = scmp.eq.s32.totalorder %s102, 0
      %s105 = sadd.s32 %s104, 1
      %s106 = scalar_select %p103, %s104, %s105
      %p109 = pneg %p103
      %p110 = scmp.eq.s32.totalorder %s12, 1
      %p111 = por %p109, %p110
      %p112 = scmp.ne.s32.totalorder %s104, %s107
      %p113 = scmp.eq.s32.totalorder %s12, 0
      %p114 = por %p112, %p113
      %p115 = scmp.ne.s32.totalorder %s104, %s107
      %p116 = scmp.eq.s32.totalorder %s17, 1
      %p117 = por %p115, %p116
      %p118 = scmp.ne.s32.totalorder %s107, %s108
      %p119 = scmp.eq.s32.totalorder %s17, 0
      %p120 = por %p118, %p119
      %p121 = scmp.ne.s32.totalorder %s107, %s108
      %p122 = scmp.eq.s32.totalorder %s18, 1
      %p123 = por %p121, %p122
      %p125 = scmp.ne.s32.totalorder %s108, %s124
      %p126 = scmp.eq.s32.totalorder %s18, 0
      %p127 = por %p125, %p126
      %p128 = scmp.le.s32.totalorder 1, %s12
      %p129 = scmp.lt.s32.totalorder %s12, 3
      %p130 = pnand %p128, %p129
      %p131 = pneg %p130
      // Predicated region
      $region9: #{tpu_custom_call.1} parent=5 // pred_check
        _
      $region10: #{tpu_custom_call.1} parent=5 // pred_check_branch
        %133 = sbr.rel (%p130) target = $region12
      $region11: #{tpu_custom_call.1} parent=5 // pred_region
        %s134 = ssub.s32 %s12, 1
        // Predicated region
        $region13: #{tpu_custom_call.1} parent=11 // pred_check
          %p135 = pneg %p71
        $region14: #{tpu_custom_call.1} parent=11 // pred_check_branch
          %137 = sbr.rel (%p135) target = $region16
        $region15: #{tpu_custom_call.1} parent=11 // pred_region
          _
        $region16: #{tpu_custom_call.1} parent=11 // pred_fallthru
          _
        // Predicated region
        $region17: #{tpu_custom_call.1} parent=11 // pred_check
          %p138 = pneg %p92
        $region18: #{tpu_custom_call.1} parent=11 // pred_check_branch
          %140 = sbr.rel (%p138) target = $region20
        $region19: #{tpu_custom_call.1} parent=11 // pred_region
          _
        $region20: #{tpu_custom_call.1} parent=11 // pred_fallthru
          _
      $region12: #{tpu_custom_call.1} parent=5 // pred_fallthru
        _
      %p141 = scmp.lt.s32.totalorder %s12, 2
      // Predicated region
      $region21: #{tpu_custom_call.1} parent=5 // pred_check
        %p142 = pneg %p141
      $region22: #{tpu_custom_call.1} parent=5 // pred_check_branch
        %144 = sbr.rel (%p142) target = $region24
      $region23: #{tpu_custom_call.1} parent=5 // pred_region
        // Predicated region
        $region25: #{tpu_custom_call.1} parent=23 // pred_check
          %p145 = pneg %p44
        $region26: #{tpu_custom_call.1} parent=23 // pred_check_branch
          %147 = sbr.rel (%p145) target = $region28
        $region27: #{tpu_custom_call.1} parent=23 // pred_region
          %p148 = scmp.lt.s32.totalorder %s19, 1
          %s149 = scalar_select %p148, %s19, 1
          %s150 = smul.addr %s149, 12
          %s151 = smul.addr %s150, 8
          %s152 = scalar_lea.vmem %s0, %s151
        $region28: #{tpu_custom_call.1} parent=23 // pred_fallthru
          _
      $region24: #{tpu_custom_call.1} parent=5 // pred_fallthru
        _
      %p153 = scmp.le.s32.totalorder 1, %s12
      %p154 = scmp.lt.s32.totalorder %s12, 3
      %p155 = pnand %p153, %p154
      %p156 = pneg %p155
      // Predicated region
      $region29: #{tpu_custom_call.1} parent=5 // pred_check
        _
      $region30: #{tpu_custom_call.1} parent=5 // pred_check_branch
        %158 = sbr.rel (%p155) target = $region32
      $region31: #{tpu_custom_call.1} parent=5 // pred_region
        %s159 = ssub.s32 %s12, 1
        %p160 = scmp.lt.s32.totalorder %s21, 1
        %s161 = scalar_select %p160, %s21, 1
        %s162 = smul.addr %s161, 12
        %s163 = smul.addr %s162, 8
        %s164 = scalar_lea.vmem %s0, %s163
        %p165 = pneg %p50
        %p166 = pneg %p47
        %p167 = pneg %p71
        %p168 = pneg %p68
        %p169 = pneg %p92
        %p170 = pneg %p89
        %p171 = pneg %p120
        %p172 = pneg %p117
        %s173 = sand.u32 %s107, 1
        %s174 = scalar_lea.sflag [#allocation3], %s173
        %s175 = sand.u32 %s107, 1
        %s176 = smul.addr %s175, 16
        %s177 = scalar_lea.vmem [#allocation2], %s176
        %p178 = scmp.lt.s32.totalorder %s21, 1
        %s179 = scalar_select %p178, %s21, 1
        %s180 = smul.addr %s179, 12
        %s181 = smul.addr %s180, 8
        %s182 = scalar_lea.vmem %s0, %s181
        %s183 = smul.u32 2, %s22
        %s184 = smul.u32 %s22, 16
        %s185 = scalar_lea.vmem %s182, %s184
        %v186 = vld [vmem:[%s185] sm:$0xff]
        %v187 = vld [vmem:[%s185 + $0x8] sm:$0xff]
        %v188 = vld [vmem:[%s185 + $0x10] sm:$0x3]
        %v189 = vld [vmem:[%s185 + $0x18] sm:$0xff]
        %v190 = vld [vmem:[%s185 + $0x20] sm:$0xff]
        %v191 = vld [vmem:[%s185 + $0x28] sm:$0x3]
        %v192 = vld [vmem:[%s185 + $0x30] sm:$0xff]
        %v193 = vld [vmem:[%s185 + $0x38] sm:$0xff]
        %v194 = vld [vmem:[%s185 + $0x40] sm:$0x3]
        %v195 = vld [vmem:[%s185 + $0x48] sm:$0xff]
        %v196 = vld [vmem:[%s185 + $0x50] sm:$0xff]
        %v197 = vld [vmem:[%s185 + $0x58] sm:$0x3]
        %206 = vrot.lane.b32.xlu0 %v186, 127
        %v207 = vpop.permute.xlu0 %206
        %208 = vrot.lane.b32.xlu0 %v187, 127
        %v209 = vpop.permute.xlu0 %208
        %210 = vrot.lane.b32.xlu0 %v189, 127
        %v211 = vpop.permute.xlu0 %210
        %212 = vrot.lane.b32.xlu0 %v190, 127
        %v213 = vpop.permute.xlu0 %212
        %214 = vrot.lane.b32.xlu0 %v192, 127
        %v215 = vpop.permute.xlu0 %214
        %216 = vrot.lane.b32.xlu0 %v193, 127
        %v217 = vpop.permute.xlu0 %216
        %218 = vrot.lane.b32.xlu0 %v195, 127
        %v219 = vpop.permute.xlu0 %218
        %220 = vrot.lane.b32.xlu0 %v196, 127
        %v221 = vpop.permute.xlu0 %220
        %230 = vrot.lane.b32.xlu0 %v186, 126
        %v231 = vpop.permute.xlu0 %230
        %232 = vrot.lane.b32.xlu0 %v187, 126
        %v233 = vpop.permute.xlu0 %232
        %234 = vrot.lane.b32.xlu0 %v189, 126
        %v235 = vpop.permute.xlu0 %234
        %236 = vrot.lane.b32.xlu0 %v190, 126
        %v237 = vpop.permute.xlu0 %236
        %238 = vrot.lane.b32.xlu0 %v192, 126
        %v239 = vpop.permute.xlu0 %238
        %240 = vrot.lane.b32.xlu0 %v193, 126
        %v241 = vpop.permute.xlu0 %240
        %242 = vrot.lane.b32.xlu0 %v195, 126
        %v243 = vpop.permute.xlu0 %242
        %244 = vrot.lane.b32.xlu0 %v196, 126
        %v245 = vpop.permute.xlu0 %244
        %vm258 = vcmask 1046528
        %v259 = vrot.slane %v186, 1
        %v260 = vrot.slane %v187, 1
        %v261 = vsel %vm258, %v259, %v260
        %v262 = vrot.slane %v188, 1
        %v263 = vsel %vm258, %v260, %v262
        %v264 = vrot.slane %v189, 1
        %v265 = vrot.slane %v190, 1
        %v266 = vsel %vm258, %v264, %v265
        %v267 = vrot.slane %v191, 1
        %v268 = vsel %vm258, %v265, %v267
        %v269 = vrot.slane %v192, 1
        %v270 = vrot.slane %v193, 1
        %v271 = vsel %vm258, %v269, %v270
        %v272 = vrot.slane %v194, 1
        %v273 = vsel %vm258, %v270, %v272
        %v274 = vrot.slane %v195, 1
        %v275 = vrot.slane %v196, 1
        %v276 = vsel %vm258, %v274, %v275
        %v277 = vrot.slane %v197, 1
        %v278 = vsel %vm258, %v275, %v277
        %287 = vrot.lane.b32.xlu0 %v261, 127
        %v288 = vpop.permute.xlu0 %287
        %289 = vrot.lane.b32.xlu0 %v263, 127
        %v290 = vpop.permute.xlu0 %289
        %291 = vrot.lane.b32.xlu0 %v266, 127
        %v292 = vpop.permute.xlu0 %291
        %293 = vrot.lane.b32.xlu0 %v268, 127
        %v294 = vpop.permute.xlu0 %293
        %295 = vrot.lane.b32.xlu0 %v271, 127
        %v296 = vpop.permute.xlu0 %295
        %297 = vrot.lane.b32.xlu0 %v273, 127
        %v298 = vpop.permute.xlu0 %297
        %299 = vrot.lane.b32.xlu0 %v276, 127
        %v300 = vpop.permute.xlu0 %299
        %301 = vrot.lane.b32.xlu0 %v278, 127
        %v302 = vpop.permute.xlu0 %301
        %311 = vrot.lane.b32.xlu0 %v261, 126
        %v312 = vpop.permute.xlu0 %311
        %313 = vrot.lane.b32.xlu0 %v263, 126
        %v314 = vpop.permute.xlu0 %313
        %315 = vrot.lane.b32.xlu0 %v266, 126
        %v316 = vpop.permute.xlu0 %315
        %317 = vrot.lane.b32.xlu0 %v268, 126
        %v318 = vpop.permute.xlu0 %317
        %319 = vrot.lane.b32.xlu0 %v271, 126
        %v320 = vpop.permute.xlu0 %319
        %321 = vrot.lane.b32.xlu0 %v273, 126
        %v322 = vpop.permute.xlu0 %321
        %323 = vrot.lane.b32.xlu0 %v276, 126
        %v324 = vpop.permute.xlu0 %323
        %325 = vrot.lane.b32.xlu0 %v278, 126
        %v326 = vpop.permute.xlu0 %325
        %vm335 = vcmask 1045504
        %v336 = vrot.slane %v186, 2
        %v337 = vrot.slane %v187, 2
        %v338 = vsel %vm335, %v336, %v337
        %v339 = vrot.slane %v188, 2
        %v340 = vsel %vm335, %v337, %v339
        %v341 = vrot.slane %v189, 2
        %v342 = vrot.slane %v190, 2
        %v343 = vsel %vm335, %v341, %v342
        %v344 = vrot.slane %v191, 2
        %v345 = vsel %vm335, %v342, %v344
        %v346 = vrot.slane %v192, 2
        %v347 = vrot.slane %v193, 2
        %v348 = vsel %vm335, %v346, %v347
        %v349 = vrot.slane %v194, 2
        %v350 = vsel %vm335, %v347, %v349
        %v351 = vrot.slane %v195, 2
        %v352 = vrot.slane %v196, 2
        %v353 = vsel %vm335, %v351, %v352
        %v354 = vrot.slane %v197, 2
        %v355 = vsel %vm335, %v352, %v354
        %364 = vrot.lane.b32.xlu0 %v338, 127
        %v365 = vpop.permute.xlu0 %364
        %366 = vrot.lane.b32.xlu0 %v340, 127
        %v367 = vpop.permute.xlu0 %366
        %368 = vrot.lane.b32.xlu0 %v343, 127
        %v369 = vpop.permute.xlu0 %368
        %370 = vrot.lane.b32.xlu0 %v345, 127
        %v371 = vpop.permute.xlu0 %370
        %372 = vrot.lane.b32.xlu0 %v348, 127
        %v373 = vpop.permute.xlu0 %372
        %374 = vrot.lane.b32.xlu0 %v350, 127
        %v375 = vpop.permute.xlu0 %374
        %376 = vrot.lane.b32.xlu0 %v353, 127
        %v377 = vpop.permute.xlu0 %376
        %378 = vrot.lane.b32.xlu0 %v355, 127
        %v379 = vpop.permute.xlu0 %378
        %388 = vrot.lane.b32.xlu0 %v338, 126
        %v389 = vpop.permute.xlu0 %388
        %390 = vrot.lane.b32.xlu0 %v340, 126
        %v391 = vpop.permute.xlu0 %390
        %392 = vrot.lane.b32.xlu0 %v343, 126
        %v393 = vpop.permute.xlu0 %392
        %394 = vrot.lane.b32.xlu0 %v345, 126
        %v395 = vpop.permute.xlu0 %394
        %396 = vrot.lane.b32.xlu0 %v348, 126
        %v397 = vpop.permute.xlu0 %396
        %398 = vrot.lane.b32.xlu0 %v350, 126
        %v399 = vpop.permute.xlu0 %398
        %400 = vrot.lane.b32.xlu0 %v353, 126
        %v401 = vpop.permute.xlu0 %400
        %402 = vrot.lane.b32.xlu0 %v355, 126
        %v403 = vpop.permute.xlu0 %402
        %v412 = vcombine.low %v186, %v192
        %v413 = vcombine.high %v186, %v192
        %v415 = vunpack.c.l.s4 1983009808
        %v416 = vunpack.c.0.s8 %v415
        %v417 = vlaneseq
        %v418 = vshrl.u32 %v417, 7
        %v419 = vsub.s32 %v416, %v418
        %v420 = vrot.slane %v412, %v419
        %v422 = vunpack.c.l.s4 1983009808
        %v423 = vunpack.c.0.s8 %v422
        %v424 = vlaneseq
        %v425 = vshrl.u32 %v424, 7
        %v426 = vsub.s32 %v423, %v425
        %v427 = vrot.slane %v413, %v426
        %v428 = vcombine.low %v189, %v195
        %v429 = vcombine.high %v189, %v195
        %v431 = vunpack.c.l.s4 1983009808
        %v432 = vunpack.c.0.s8 %v431
        %v433 = vlaneseq
        %v434 = vshrl.u32 %v433, 7
        %v435 = vsub.s32 %v432, %v434
        %v436 = vrot.slane %v428, %v435
        %v438 = vunpack.c.l.s4 1983009808
        %v439 = vunpack.c.0.s8 %v438
        %v440 = vlaneseq
        %v441 = vshrl.u32 %v440, 7
        %v442 = vsub.s32 %v439, %v441
        %v443 = vrot.slane %v429, %v442
        %v444 = vcombine.low %v207, %v215
        %v445 = vcombine.high %v207, %v215
        %v447 = vunpack.c.l.s4 1983009808
        %v448 = vunpack.c.0.s8 %v447
        %v449 = vlaneseq
        %v450 = vshrl.u32 %v449, 7
        %v451 = vsub.s32 %v448, %v450
        %v452 = vrot.slane %v444, %v451
        %v454 = vunpack.c.l.s4 1983009808
        %v455 = vunpack.c.0.s8 %v454
        %v456 = vlaneseq
        %v457 = vshrl.u32 %v456, 7
        %v458 = vsub.s32 %v455, %v457
        %v459 = vrot.slane %v445, %v458
        %v460 = vcombine.low %v211, %v219
        %v461 = vcombine.high %v211, %v219
        %v463 = vunpack.c.l.s4 1983009808
        %v464 = vunpack.c.0.s8 %v463
        %v465 = vlaneseq
        %v466 = vshrl.u32 %v465, 7
        %v467 = vsub.s32 %v464, %v466
        %v468 = vrot.slane %v460, %v467
        %v470 = vunpack.c.l.s4 1983009808
        %v471 = vunpack.c.0.s8 %v470
        %v472 = vlaneseq
        %v473 = vshrl.u32 %v472, 7
        %v474 = vsub.s32 %v471, %v473
        %v475 = vrot.slane %v461, %v474
        %v476 = vcombine.low %v420, %v436
        %v477 = vcombine.high %v420, %v436
        %v479 = vunpack.c.l.s4 1934713408
        %v480 = vunpack.c.0.s8 %v479
        %v481 = vlaneseq
        %v482 = vshrl.u32 %v481, 7
        %v483 = vsub.s32 %v480, %v482
        %v484 = vrot.slane %v476, %v483
        %v486 = vunpack.c.l.s4 1934713408
        %v487 = vunpack.c.0.s8 %v486
        %v488 = vlaneseq
        %v489 = vshrl.u32 %v488, 7
        %v490 = vsub.s32 %v487, %v489
        %v491 = vrot.slane %v477, %v490
        %v492 = vcombine.low %v427, %v443
        %v493 = vcombine.high %v427, %v443
        %v495 = vunpack.c.l.s4 1934713408
        %v496 = vunpack.c.0.s8 %v495
        %v497 = vlaneseq
        %v498 = vshrl.u32 %v497, 7
        %v499 = vsub.s32 %v496, %v498
        %v500 = vrot.slane %v492, %v499
        %v502 = vunpack.c.l.s4 1934713408
        %v503 = vunpack.c.0.s8 %v502
        %v504 = vlaneseq
        %v505 = vshrl.u32 %v504, 7
        %v506 = vsub.s32 %v503, %v505
        %v507 = vrot.slane %v493, %v506
        %v508 = vcombine.low %v452, %v468
        %v509 = vcombine.high %v452, %v468
        %v511 = vunpack.c.l.s4 1934713408
        %v512 = vunpack.c.0.s8 %v511
        %v513 = vlaneseq
        %v514 = vshrl.u32 %v513, 7
        %v515 = vsub.s32 %v512, %v514
        %v516 = vrot.slane %v508, %v515
        %v518 = vunpack.c.l.s4 1934713408
        %v519 = vunpack.c.0.s8 %v518
        %v520 = vlaneseq
        %v521 = vshrl.u32 %v520, 7
        %v522 = vsub.s32 %v519, %v521
        %v523 = vrot.slane %v509, %v522
        %v524 = vcombine.low %v459, %v475
        %v525 = vcombine.high %v459, %v475
        %v527 = vunpack.c.l.s4 1934713408
        %v528 = vunpack.c.0.s8 %v527
        %v529 = vlaneseq
        %v530 = vshrl.u32 %v529, 7
        %v531 = vsub.s32 %v528, %v530
        %v532 = vrot.slane %v524, %v531
        %v534 = vunpack.c.l.s4 1934713408
        %v535 = vunpack.c.0.s8 %v534
        %v536 = vlaneseq
        %v537 = vshrl.u32 %v536, 7
        %v538 = vsub.s32 %v535, %v537
        %v539 = vrot.slane %v525, %v538
        %v540 = vcombine.low %v484, %v516
        %v541 = vcombine.high %v484, %v516
        %v542 = vcombine.low %v491, %v523
        %v543 = vcombine.high %v491, %v523
        %v544 = vcombine.low %v500, %v532
        %v545 = vcombine.high %v500, %v532
        %v546 = vcombine.low %v507, %v539
        %v547 = vcombine.high %v507, %v539
        %v548 = vcombine.low %v231, %v239
        %v549 = vcombine.high %v231, %v239
        %v551 = vunpack.c.l.s4 1983009808
        %v552 = vunpack.c.0.s8 %v551
        %v553 = vlaneseq
        %v554 = vshrl.u32 %v553, 7
        %v555 = vsub.s32 %v552, %v554
        %v556 = vrot.slane %v548, %v555
        %v558 = vunpack.c.l.s4 1983009808
        %v559 = vunpack.c.0.s8 %v558
        %v560 = vlaneseq
        %v561 = vshrl.u32 %v560, 7
        %v562 = vsub.s32 %v559, %v561
        %v563 = vrot.slane %v549, %v562
        %v564 = vcombine.low %v235, %v243
        %v565 = vcombine.high %v235, %v243
        %v567 = vunpack.c.l.s4 1983009808
        %v568 = vunpack.c.0.s8 %v567
        %v569 = vlaneseq
        %v570 = vshrl.u32 %v569, 7
        %v571 = vsub.s32 %v568, %v570
        %v572 = vrot.slane %v564, %v571
        %v574 = vunpack.c.l.s4 1983009808
        %v575 = vunpack.c.0.s8 %v574
        %v576 = vlaneseq
        %v577 = vshrl.u32 %v576, 7
        %v578 = vsub.s32 %v575, %v577
        %v579 = vrot.slane %v565, %v578
        %v580 = vcombine.low %v261, %v271
        %v581 = vcombine.high %v261, %v271
        %v583 = vunpack.c.l.s4 1983009808
        %v584 = vunpack.c.0.s8 %v583
        %v585 = vlaneseq
        %v586 = vshrl.u32 %v585, 7
        %v587 = vsub.s32 %v584, %v586
        %v588 = vrot.slane %v580, %v587
        %v590 = vunpack.c.l.s4 1983009808
        %v591 = vunpack.c.0.s8 %v590
        %v592 = vlaneseq
        %v593 = vshrl.u32 %v592, 7
        %v594 = vsub.s32 %v591, %v593
        %v595 = vrot.slane %v581, %v594
        %v596 = vcombine.low %v266, %v276
        %v597 = vcombine.high %v266, %v276
        %v599 = vunpack.c.l.s4 1983009808
        %v600 = vunpack.c.0.s8 %v599
        %v601 = vlaneseq
        %v602 = vshrl.u32 %v601, 7
        %v603 = vsub.s32 %v600, %v602
        %v604 = vrot.slane %v596, %v603
        %v606 = vunpack.c.l.s4 1983009808
        %v607 = vunpack.c.0.s8 %v606
        %v608 = vlaneseq
        %v609 = vshrl.u32 %v608, 7
        %v610 = vsub.s32 %v607, %v609
        %v611 = vrot.slane %v597, %v610
        %v612 = vcombine.low %v556, %v572
        %v613 = vcombine.high %v556, %v572
        %v615 = vunpack.c.l.s4 1934713408
        %v616 = vunpack.c.0.s8 %v615
        %v617 = vlaneseq
        %v618 = vshrl.u32 %v617, 7
        %v619 = vsub.s32 %v616, %v618
        %v620 = vrot.slane %v612, %v619
        %v622 = vunpack.c.l.s4 1934713408
        %v623 = vunpack.c.0.s8 %v622
        %v624 = vlaneseq
        %v625 = vshrl.u32 %v624, 7
        %v626 = vsub.s32 %v623, %v625
        %v627 = vrot.slane %v613, %v626
        %v628 = vcombine.low %v563, %v579
        %v629 = vcombine.high %v563, %v579
        %v631 = vunpack.c.l.s4 1934713408
        %v632 = vunpack.c.0.s8 %v631
        %v633 = vlaneseq
        %v634 = vshrl.u32 %v633, 7
        %v635 = vsub.s32 %v632, %v634
        %v636 = vrot.slane %v628, %v635
        %v638 = vunpack.c.l.s4 1934713408
        %v639 = vunpack.c.0.s8 %v638
        %v640 = vlaneseq
        %v641 = vshrl.u32 %v640, 7
        %v642 = vsub.s32 %v639, %v641
        %v643 = vrot.slane %v629, %v642
        %v644 = vcombine.low %v588, %v604
        %v645 = vcombine.high %v588, %v604
        %v647 = vunpack.c.l.s4 1934713408
        %v648 = vunpack.c.0.s8 %v647
        %v649 = vlaneseq
        %v650 = vshrl.u32 %v649, 7
        %v651 = vsub.s32 %v648, %v650
        %v652 = vrot.slane %v644, %v651
        %v654 = vunpack.c.l.s4 1934713408
        %v655 = vunpack.c.0.s8 %v654
        %v656 = vlaneseq
        %v657 = vshrl.u32 %v656, 7
        %v658 = vsub.s32 %v655, %v657
        %v659 = vrot.slane %v645, %v658
        %v660 = vcombine.low %v595, %v611
        %v661 = vcombine.high %v595, %v611
        %v663 = vunpack.c.l.s4 1934713408
        %v664 = vunpack.c.0.s8 %v663
        %v665 = vlaneseq
        %v666 = vshrl.u32 %v665, 7
        %v667 = vsub.s32 %v664, %v666
        %v668 = vrot.slane %v660, %v667
        %v670 = vunpack.c.l.s4 1934713408
        %v671 = vunpack.c.0.s8 %v670
        %v672 = vlaneseq
        %v673 = vshrl.u32 %v672, 7
        %v674 = vsub.s32 %v671, %v673
        %v675 = vrot.slane %v661, %v674
        %v676 = vcombine.low %v620, %v652
        %v677 = vcombine.high %v620, %v652
        %v678 = vcombine.low %v627, %v659
        %v679 = vcombine.high %v627, %v659
        %v680 = vcombine.low %v636, %v668
        %v681 = vcombine.high %v636, %v668
        %v682 = vcombine.low %v643, %v675
        %v683 = vcombine.high %v643, %v675
        %v684 = vcombine.low %v288, %v296
        %v685 = vcombine.high %v288, %v296
        %v687 = vunpack.c.l.s4 1983009808
        %v688 = vunpack.c.0.s8 %v687
        %v689 = vlaneseq
        %v690 = vshrl.u32 %v689, 7
        %v691 = vsub.s32 %v688, %v690
        %v692 = vrot.slane %v684, %v691
        %v694 = vunpack.c.l.s4 1983009808
        %v695 = vunpack.c.0.s8 %v694
        %v696 = vlaneseq
        %v697 = vshrl.u32 %v696, 7
        %v698 = vsub.s32 %v695, %v697
        %v699 = vrot.slane %v685, %v698
        %v700 = vcombine.low %v292, %v300
        %v701 = vcombine.high %v292, %v300
        %v703 = vunpack.c.l.s4 1983009808
        %v704 = vunpack.c.0.s8 %v703
        %v705 = vlaneseq
        %v706 = vshrl.u32 %v705, 7
        %v707 = vsub.s32 %v704, %v706
        %v708 = vrot.slane %v700, %v707
        %v710 = vunpack.c.l.s4 1983009808
        %v711 = vunpack.c.0.s8 %v710
        %v712 = vlaneseq
        %v713 = vshrl.u32 %v712, 7
        %v714 = vsub.s32 %v711, %v713
        %v715 = vrot.slane %v701, %v714
        %v716 = vcombine.low %v312, %v320
        %v717 = vcombine.high %v312, %v320
        %v719 = vunpack.c.l.s4 1983009808
        %v720 = vunpack.c.0.s8 %v719
        %v721 = vlaneseq
        %v722 = vshrl.u32 %v721, 7
        %v723 = vsub.s32 %v720, %v722
        %v724 = vrot.slane %v716, %v723
        %v726 = vunpack.c.l.s4 1983009808
        %v727 = vunpack.c.0.s8 %v726
        %v728 = vlaneseq
        %v729 = vshrl.u32 %v728, 7
        %v730 = vsub.s32 %v727, %v729
        %v731 = vrot.slane %v717, %v730
        %v732 = vcombine.low %v316, %v324
        %v733 = vcombine.high %v316, %v324
        %v735 = vunpack.c.l.s4 1983009808
        %v736 = vunpack.c.0.s8 %v735
        %v737 = vlaneseq
        %v738 = vshrl.u32 %v737, 7
        %v739 = vsub.s32 %v736, %v738
        %v740 = vrot.slane %v732, %v739
        %v742 = vunpack.c.l.s4 1983009808
        %v743 = vunpack.c.0.s8 %v742
        %v744 = vlaneseq
        %v745 = vshrl.u32 %v744, 7
        %v746 = vsub.s32 %v743, %v745
        %v747 = vrot.slane %v733, %v746
        %v748 = vcombine.low %v692, %v708
        %v749 = vcombine.high %v692, %v708
        %v751 = vunpack.c.l.s4 1934713408
        %v752 = vunpack.c.0.s8 %v751
        %v753 = vlaneseq
        %v754 = vshrl.u32 %v753, 7
        %v755 = vsub.s32 %v752, %v754
        %v756 = vrot.slane %v748, %v755
        %v758 = vunpack.c.l.s4 1934713408
        %v759 = vunpack.c.0.s8 %v758
        %v760 = vlaneseq
        %v761 = vshrl.u32 %v760, 7
        %v762 = vsub.s32 %v759, %v761
        %v763 = vrot.slane %v749, %v762
        %v764 = vcombine.low %v699, %v715
        %v765 = vcombine.high %v699, %v715
        %v767 = vunpack.c.l.s4 1934713408
        %v768 = vunpack.c.0.s8 %v767
        %v769 = vlaneseq
        %v770 = vshrl.u32 %v769, 7
        %v771 = vsub.s32 %v768, %v770
        %v772 = vrot.slane %v764, %v771
        %v774 = vunpack.c.l.s4 1934713408
        %v775 = vunpack.c.0.s8 %v774
        %v776 = vlaneseq
        %v777 = vshrl.u32 %v776, 7
        %v778 = vsub.s32 %v775, %v777
        %v779 = vrot.slane %v765, %v778
        %v780 = vcombine.low %v724, %v740
        %v781 = vcombine.high %v724, %v740
        %v783 = vunpack.c.l.s4 1934713408
        %v784 = vunpack.c.0.s8 %v783
        %v785 = vlaneseq
        %v786 = vshrl.u32 %v785, 7
        %v787 = vsub.s32 %v784, %v786
        %v788 = vrot.slane %v780, %v787
        %v790 = vunpack.c.l.s4 1934713408
        %v791 = vunpack.c.0.s8 %v790
        %v792 = vlaneseq
        %v793 = vshrl.u32 %v792, 7
        %v794 = vsub.s32 %v791, %v793
        %v795 = vrot.slane %v781, %v794
        %v796 = vcombine.low %v731, %v747
        %v797 = vcombine.high %v731, %v747
        %v799 = vunpack.c.l.s4 1934713408
        %v800 = vunpack.c.0.s8 %v799
        %v801 = vlaneseq
        %v802 = vshrl.u32 %v801, 7
        %v803 = vsub.s32 %v800, %v802
        %v804 = vrot.slane %v796, %v803
        %v806 = vunpack.c.l.s4 1934713408
        %v807 = vunpack.c.0.s8 %v806
        %v808 = vlaneseq
        %v809 = vshrl.u32 %v808, 7
        %v810 = vsub.s32 %v807, %v809
        %v811 = vrot.slane %v797, %v810
        %v812 = vcombine.low %v756, %v788
        %v813 = vcombine.high %v756, %v788
        %v814 = vcombine.low %v763, %v795
        %v815 = vcombine.high %v763, %v795
        %v816 = vcombine.low %v772, %v804
        %v817 = vcombine.high %v772, %v804
        %v818 = vcombine.low %v779, %v811
        %v819 = vcombine.high %v779, %v811
        %v820 = vcombine.low %v338, %v348
        %v821 = vcombine.high %v338, %v348
        %v823 = vunpack.c.l.s4 1983009808
        %v824 = vunpack.c.0.s8 %v823
        %v825 = vlaneseq
        %v826 = vshrl.u32 %v825, 7
        %v827 = vsub.s32 %v824, %v826
        %v828 = vrot.slane %v820, %v827
        %v830 = vunpack.c.l.s4 1983009808
        %v831 = vunpack.c.0.s8 %v830
        %v832 = vlaneseq
        %v833 = vshrl.u32 %v832, 7
        %v834 = vsub.s32 %v831, %v833
        %v835 = vrot.slane %v821, %v834
        %v836 = vcombine.low %v343, %v353
        %v837 = vcombine.high %v343, %v353
        %v839 = vunpack.c.l.s4 1983009808
        %v840 = vunpack.c.0.s8 %v839
        %v841 = vlaneseq
        %v842 = vshrl.u32 %v841, 7
        %v843 = vsub.s32 %v840, %v842
        %v844 = vrot.slane %v836, %v843
        %v846 = vunpack.c.l.s4 1983009808
        %v847 = vunpack.c.0.s8 %v846
        %v848 = vlaneseq
        %v849 = vshrl.u32 %v848, 7
        %v850 = vsub.s32 %v847, %v849
        %v851 = vrot.slane %v837, %v850
        %v852 = vcombine.low %v365, %v373
        %v853 = vcombine.high %v365, %v373
        %v855 = vunpack.c.l.s4 1983009808
        %v856 = vunpack.c.0.s8 %v855
        %v857 = vlaneseq
        %v858 = vshrl.u32 %v857, 7
        %v859 = vsub.s32 %v856, %v858
        %v860 = vrot.slane %v852, %v859
        %v862 = vunpack.c.l.s4 1983009808
        %v863 = vunpack.c.0.s8 %v862
        %v864 = vlaneseq
        %v865 = vshrl.u32 %v864, 7
        %v866 = vsub.s32 %v863, %v865
        %v867 = vrot.slane %v853, %v866
        %v868 = vcombine.low %v369, %v377
        %v869 = vcombine.high %v369, %v377
        %v871 = vunpack.c.l.s4 1983009808
        %v872 = vunpack.c.0.s8 %v871
        %v873 = vlaneseq
        %v874 = vshrl.u32 %v873, 7
        %v875 = vsub.s32 %v872, %v874
        %v876 = vrot.slane %v868, %v875
        %v878 = vunpack.c.l.s4 1983009808
        %v879 = vunpack.c.0.s8 %v878
        %v880 = vlaneseq
        %v881 = vshrl.u32 %v880, 7
        %v882 = vsub.s32 %v879, %v881
        %v883 = vrot.slane %v869, %v882
        %v884 = vcombine.low %v828, %v844
        %v885 = vcombine.high %v828, %v844
        %v887 = vunpack.c.l.s4 1934713408
        %v888 = vunpack.c.0.s8 %v887
        %v889 = vlaneseq
        %v890 = vshrl.u32 %v889, 7
        %v891 = vsub.s32 %v888, %v890
        %v892 = vrot.slane %v884, %v891
        %v894 = vunpack.c.l.s4 1934713408
        %v895 = vunpack.c.0.s8 %v894
        %v896 = vlaneseq
        %v897 = vshrl.u32 %v896, 7
        %v898 = vsub.s32 %v895, %v897
        %v899 = vrot.slane %v885, %v898
        %v900 = vcombine.low %v835, %v851
        %v901 = vcombine.high %v835, %v851
        %v903 = vunpack.c.l.s4 1934713408
        %v904 = vunpack.c.0.s8 %v903
        %v905 = vlaneseq
        %v906 = vshrl.u32 %v905, 7
        %v907 = vsub.s32 %v904, %v906
        %v908 = vrot.slane %v900, %v907
        %v910 = vunpack.c.l.s4 1934713408
        %v911 = vunpack.c.0.s8 %v910
        %v912 = vlaneseq
        %v913 = vshrl.u32 %v912, 7
        %v914 = vsub.s32 %v911, %v913
        %v915 = vrot.slane %v901, %v914
        %v916 = vcombine.low %v860, %v876
        %v917 = vcombine.high %v860, %v876
        %v919 = vunpack.c.l.s4 1934713408
        %v920 = vunpack.c.0.s8 %v919
        %v921 = vlaneseq
        %v922 = vshrl.u32 %v921, 7
        %v923 = vsub.s32 %v920, %v922
        %v924 = vrot.slane %v916, %v923
        %v926 = vunpack.c.l.s4 1934713408
        %v927 = vunpack.c.0.s8 %v926
        %v928 = vlaneseq
        %v929 = vshrl.u32 %v928, 7
        %v930 = vsub.s32 %v927, %v929
        %v931 = vrot.slane %v917, %v930
        %v932 = vcombine.low %v867, %v883
        %v933 = vcombine.high %v867, %v883
        %v935 = vunpack.c.l.s4 1934713408
        %v936 = vunpack.c.0.s8 %v935
        %v937 = vlaneseq
        %v938 = vshrl.u32 %v937, 7
        %v939 = vsub.s32 %v936, %v938
        %v940 = vrot.slane %v932, %v939
        %v942 = vunpack.c.l.s4 1934713408
        %v943 = vunpack.c.0.s8 %v942
        %v944 = vlaneseq
        %v945 = vshrl.u32 %v944, 7
        %v946 = vsub.s32 %v943, %v945
        %v947 = vrot.slane %v933, %v946
        %v948 = vcombine.low %v892, %v924
        %v949 = vcombine.high %v892, %v924
        %v950 = vcombine.low %v899, %v931
        %v951 = vcombine.high %v899, %v931
        %v952 = vcombine.low %v908, %v940
        %v953 = vcombine.high %v908, %v940
        %v954 = vcombine.low %v915, %v947
        %v955 = vcombine.high %v915, %v947
        %v956 = vcombine.low %v389, %v397
        %v957 = vcombine.high %v389, %v397
        %v959 = vunpack.c.l.s4 1983009808
        %v960 = vunpack.c.0.s8 %v959
        %v961 = vlaneseq
        %v962 = vshrl.u32 %v961, 7
        %v963 = vsub.s32 %v960, %v962
        %v964 = vrot.slane %v956, %v963
        %v966 = vunpack.c.l.s4 1983009808
        %v967 = vunpack.c.0.s8 %v966
        %v968 = vlaneseq
        %v969 = vshrl.u32 %v968, 7
        %v970 = vsub.s32 %v967, %v969
        %v971 = vrot.slane %v957, %v970
        %v972 = vcombine.low %v393, %v401
        %v973 = vcombine.high %v393, %v401
        %v975 = vunpack.c.l.s4 1983009808
        %v976 = vunpack.c.0.s8 %v975
        %v977 = vlaneseq
        %v978 = vshrl.u32 %v977, 7
        %v979 = vsub.s32 %v976, %v978
        %v980 = vrot.slane %v972, %v979
        %v982 = vunpack.c.l.s4 1983009808
        %v983 = vunpack.c.0.s8 %v982
        %v984 = vlaneseq
        %v985 = vshrl.u32 %v984, 7
        %v986 = vsub.s32 %v983, %v985
        %v987 = vrot.slane %v973, %v986
        %v988 = vcombine.low %v964, %v980
        %v989 = vcombine.high %v964, %v980
        %v991 = vunpack.c.l.s4 1934713408
        %v992 = vunpack.c.0.s8 %v991
        %v993 = vlaneseq
        %v994 = vshrl.u32 %v993, 7
        %v995 = vsub.s32 %v992, %v994
        %v996 = vrot.slane %v988, %v995
        %v998 = vunpack.c.l.s4 1934713408
        %v999 = vunpack.c.0.s8 %v998
        %v1000 = vlaneseq
        %v1001 = vshrl.u32 %v1000, 7
        %v1002 = vsub.s32 %v999, %v1001
        %v1003 = vrot.slane %v989, %v1002
        %v1004 = vcombine.low %v971, %v987
        %v1005 = vcombine.high %v971, %v987
        %v1007 = vunpack.c.l.s4 1934713408
        %v1008 = vunpack.c.0.s8 %v1007
        %v1009 = vlaneseq
        %v1010 = vshrl.u32 %v1009, 7
        %v1011 = vsub.s32 %v1008, %v1010
        %v1012 = vrot.slane %v1004, %v1011
        %v1014 = vunpack.c.l.s4 1934713408
        %v1015 = vunpack.c.0.s8 %v1014
        %v1016 = vlaneseq
        %v1017 = vshrl.u32 %v1016, 7
        %v1018 = vsub.s32 %v1015, %v1017
        %v1019 = vrot.slane %v1005, %v1018
        %v1020 = vcombine.high %v996, 0.0
        %v1021 = vcombine.high %v1003, 0.0
        %v1022 = vcombine.high %v1012, 0.0
        %v1023 = vcombine.high %v1019, 0.0
        %v1024 = vcombine.low %v187, %v193
        %v1025 = vcombine.high %v187, %v193
        %v1027 = vunpack.c.l.s4 1983009808
        %v1028 = vunpack.c.0.s8 %v1027
        %v1029 = vlaneseq
        %v1030 = vshrl.u32 %v1029, 7
        %v1031 = vsub.s32 %v1028, %v1030
        %v1032 = vrot.slane %v1024, %v1031
        %v1034 = vunpack.c.l.s4 1983009808
        %v1035 = vunpack.c.0.s8 %v1034
        %v1036 = vlaneseq
        %v1037 = vshrl.u32 %v1036, 7
        %v1038 = vsub.s32 %v1035, %v1037
        %v1039 = vrot.slane %v1025, %v1038
        %v1040 = vcombine.low %v190, %v196
        %v1041 = vcombine.high %v190, %v196
        %v1043 = vunpack.c.l.s4 1983009808
        %v1044 = vunpack.c.0.s8 %v1043
        %v1045 = vlaneseq
        %v1046 = vshrl.u32 %v1045, 7
        %v1047 = vsub.s32 %v1044, %v1046
        %v1048 = vrot.slane %v1040, %v1047
        %v1050 = vunpack.c.l.s4 1983009808
        %v1051 = vunpack.c.0.s8 %v1050
        %v1052 = vlaneseq
        %v1053 = vshrl.u32 %v1052, 7
        %v1054 = vsub.s32 %v1051, %v1053
        %v1055 = vrot.slane %v1041, %v1054
        %v1056 = vcombine.low %v209, %v217
        %v1057 = vcombine.high %v209, %v217
        %v1059 = vunpack.c.l.s4 1983009808
        %v1060 = vunpack.c.0.s8 %v1059
        %v1061 = vlaneseq
        %v1062 = vshrl.u32 %v1061, 7
        %v1063 = vsub.s32 %v1060, %v1062
        %v1064 = vrot.slane %v1056, %v1063
        %v1066 = vunpack.c.l.s4 1983009808
        %v1067 = vunpack.c.0.s8 %v1066
        %v1068 = vlaneseq
        %v1069 = vshrl.u32 %v1068, 7
        %v1070 = vsub.s32 %v1067, %v1069
        %v1071 = vrot.slane %v1057, %v1070
        %v1072 = vcombine.low %v213, %v221
        %v1073 = vcombine.high %v213, %v221
        %v1075 = vunpack.c.l.s4 1983009808
        %v1076 = vunpack.c.0.s8 %v1075
        %v1077 = vlaneseq
        %v1078 = vshrl.u32 %v1077, 7
        %v1079 = vsub.s32 %v1076, %v1078
        %v1080 = vrot.slane %v1072, %v1079
        %v1082 = vunpack.c.l.s4 1983009808
        %v1083 = vunpack.c.0.s8 %v1082
        %v1084 = vlaneseq
        %v1085 = vshrl.u32 %v1084, 7
        %v1086 = vsub.s32 %v1083, %v1085
        %v1087 = vrot.slane %v1073, %v1086
        %v1088 = vcombine.low %v1032, %v1048
        %v1089 = vcombine.high %v1032, %v1048
        %v1091 = vunpack.c.l.s4 1934713408
        %v1092 = vunpack.c.0.s8 %v1091
        %v1093 = vlaneseq
        %v1094 = vshrl.u32 %v1093, 7
        %v1095 = vsub.s32 %v1092, %v1094
        %v1096 = vrot.slane %v1088, %v1095
        %v1098 = vunpack.c.l.s4 1934713408
        %v1099 = vunpack.c.0.s8 %v1098
        %v1100 = vlaneseq
        %v1101 = vshrl.u32 %v1100, 7
        %v1102 = vsub.s32 %v1099, %v1101
        %v1103 = vrot.slane %v1089, %v1102
        %v1104 = vcombine.low %v1039, %v1055
        %v1105 = vcombine.high %v1039, %v1055
        %v1107 = vunpack.c.l.s4 1934713408
        %v1108 = vunpack.c.0.s8 %v1107
        %v1109 = vlaneseq
        %v1110 = vshrl.u32 %v1109, 7
        %v1111 = vsub.s32 %v1108, %v1110
        %v1112 = vrot.slane %v1104, %v1111
        %v1114 = vunpack.c.l.s4 1934713408
        %v1115 = vunpack.c.0.s8 %v1114
        %v1116 = vlaneseq
        %v1117 = vshrl.u32 %v1116, 7
        %v1118 = vsub.s32 %v1115, %v1117
        %v1119 = vrot.slane %v1105, %v1118
        %v1120 = vcombine.low %v1064, %v1080
        %v1121 = vcombine.high %v1064, %v1080
        %v1123 = vunpack.c.l.s4 1934713408
        %v1124 = vunpack.c.0.s8 %v1123
        %v1125 = vlaneseq
        %v1126 = vshrl.u32 %v1125, 7
        %v1127 = vsub.s32 %v1124, %v1126
        %v1128 = vrot.slane %v1120, %v1127
        %v1130 = vunpack.c.l.s4 1934713408
        %v1131 = vunpack.c.0.s8 %v1130
        %v1132 = vlaneseq
        %v1133 = vshrl.u32 %v1132, 7
        %v1134 = vsub.s32 %v1131, %v1133
        %v1135 = vrot.slane %v1121, %v1134
        %v1136 = vcombine.low %v1071, %v1087
        %v1137 = vcombine.high %v1071, %v1087
        %v1139 = vunpack.c.l.s4 1934713408
        %v1140 = vunpack.c.0.s8 %v1139
        %v1141 = vlaneseq
        %v1142 = vshrl.u32 %v1141, 7
        %v1143 = vsub.s32 %v1140, %v1142
        %v1144 = vrot.slane %v1136, %v1143
        %v1146 = vunpack.c.l.s4 1934713408
        %v1147 = vunpack.c.0.s8 %v1146
        %v1148 = vlaneseq
        %v1149 = vshrl.u32 %v1148, 7
        %v1150 = vsub.s32 %v1147, %v1149
        %v1151 = vrot.slane %v1137, %v1150
        %v1152 = vcombine.low %v1096, %v1128
        %v1153 = vcombine.high %v1096, %v1128
        %v1154 = vcombine.low %v1103, %v1135
        %v1155 = vcombine.high %v1103, %v1135
        %v1156 = vcombine.low %v1112, %v1144
        %v1157 = vcombine.high %v1112, %v1144
        %v1158 = vcombine.low %v1119, %v1151
        %v1159 = vcombine.high %v1119, %v1151
        %v1160 = vcombine.low %v233, %v241
        %v1161 = vcombine.high %v233, %v241
        %v1163 = vunpack.c.l.s4 1983009808
        %v1164 = vunpack.c.0.s8 %v1163
        %v1165 = vlaneseq
        %v1166 = vshrl.u32 %v1165, 7
        %v1167 = vsub.s32 %v1164, %v1166
        %v1168 = vrot.slane %v1160, %v1167
        %v1170 = vunpack.c.l.s4 1983009808
        %v1171 = vunpack.c.0.s8 %v1170
        %v1172 = vlaneseq
        %v1173 = vshrl.u32 %v1172, 7
        %v1174 = vsub.s32 %v1171, %v1173
        %v1175 = vrot.slane %v1161, %v1174
        %v1176 = vcombine.low %v237, %v245
        %v1177 = vcombine.high %v237, %v245
        %v1179 = vunpack.c.l.s4 1983009808
        %v1180 = vunpack.c.0.s8 %v1179
        %v1181 = vlaneseq
        %v1182 = vshrl.u32 %v1181, 7
        %v1183 = vsub.s32 %v1180, %v1182
        %v1184 = vrot.slane %v1176, %v1183
        %v1186 = vunpack.c.l.s4 1983009808
        %v1187 = vunpack.c.0.s8 %v1186
        %v1188 = vlaneseq
        %v1189 = vshrl.u32 %v1188, 7
        %v1190 = vsub.s32 %v1187, %v1189
        %v1191 = vrot.slane %v1177, %v1190
        %v1192 = vcombine.low %v263, %v273
        %v1193 = vcombine.high %v263, %v273
        %v1195 = vunpack.c.l.s4 1983009808
        %v1196 = vunpack.c.0.s8 %v1195
        %v1197 = vlaneseq
        %v1198 = vshrl.u32 %v1197, 7
        %v1199 = vsub.s32 %v1196, %v1198
        %v1200 = vrot.slane %v1192, %v1199
        %v1202 = vunpack.c.l.s4 1983009808
        %v1203 = vunpack.c.0.s8 %v1202
        %v1204 = vlaneseq
        %v1205 = vshrl.u32 %v1204, 7
        %v1206 = vsub.s32 %v1203, %v1205
        %v1207 = vrot.slane %v1193, %v1206
        %v1208 = vcombine.low %v268, %v278
        %v1209 = vcombine.high %v268, %v278
        %v1211 = vunpack.c.l.s4 1983009808
        %v1212 = vunpack.c.0.s8 %v1211
        %v1213 = vlaneseq
        %v1214 = vshrl.u32 %v1213, 7
        %v1215 = vsub.s32 %v1212, %v1214
        %v1216 = vrot.slane %v1208, %v1215
        %v1218 = vunpack.c.l.s4 1983009808
        %v1219 = vunpack.c.0.s8 %v1218
        %v1220 = vlaneseq
        %v1221 = vshrl.u32 %v1220, 7
        %v1222 = vsub.s32 %v1219, %v1221
        %v1223 = vrot.slane %v1209, %v1222
        %v1224 = vcombine.low %v1168, %v1184
        %v1225 = vcombine.high %v1168, %v1184
        %v1227 = vunpack.c.l.s4 1934713408
        %v1228 = vunpack.c.0.s8 %v1227
        %v1229 = vlaneseq
        %v1230 = vshrl.u32 %v1229, 7
        %v1231 = vsub.s32 %v1228, %v1230
        %v1232 = vrot.slane %v1224, %v1231
        %v1234 = vunpack.c.l.s4 1934713408
        %v1235 = vunpack.c.0.s8 %v1234
        %v1236 = vlaneseq
        %v1237 = vshrl.u32 %v1236, 7
        %v1238 = vsub.s32 %v1235, %v1237
        %v1239 = vrot.slane %v1225, %v1238
        %v1240 = vcombine.low %v1175, %v1191
        %v1241 = vcombine.high %v1175, %v1191
        %v1243 = vunpack.c.l.s4 1934713408
        %v1244 = vunpack.c.0.s8 %v1243
        %v1245 = vlaneseq
        %v1246 = vshrl.u32 %v1245, 7
        %v1247 = vsub.s32 %v1244, %v1246
        %v1248 = vrot.slane %v1240, %v1247
        %v1250 = vunpack.c.l.s4 1934713408
        %v1251 = vunpack.c.0.s8 %v1250
        %v1252 = vlaneseq
        %v1253 = vshrl.u32 %v1252, 7
        %v1254 = vsub.s32 %v1251, %v1253
        %v1255 = vrot.slane %v1241, %v1254
        %v1256 = vcombine.low %v1200, %v1216
        %v1257 = vcombine.high %v1200, %v1216
        %v1259 = vunpack.c.l.s4 1934713408
        %v1260 = vunpack.c.0.s8 %v1259
        %v1261 = vlaneseq
        %v1262 = vshrl.u32 %v1261, 7
        %v1263 = vsub.s32 %v1260, %v1262
        %v1264 = vrot.slane %v1256, %v1263
        %v1266 = vunpack.c.l.s4 1934713408
        %v1267 = vunpack.c.0.s8 %v1266
        %v1268 = vlaneseq
        %v1269 = vshrl.u32 %v1268, 7
        %v1270 = vsub.s32 %v1267, %v1269
        %v1271 = vrot.slane %v1257, %v1270
        %v1272 = vcombine.low %v1207, %v1223
        %v1273 = vcombine.high %v1207, %v1223
        %v1275 = vunpack.c.l.s4 1934713408
        %v1276 = vunpack.c.0.s8 %v1275
        %v1277 = vlaneseq
        %v1278 = vshrl.u32 %v1277, 7
        %v1279 = vsub.s32 %v1276, %v1278
        %v1280 = vrot.slane %v1272, %v1279
        %v1282 = vunpack.c.l.s4 1934713408
        %v1283 = vunpack.c.0.s8 %v1282
        %v1284 = vlaneseq
        %v1285 = vshrl.u32 %v1284, 7
        %v1286 = vsub.s32 %v1283, %v1285
        %v1287 = vrot.slane %v1273, %v1286
        %v1288 = vcombine.low %v1232, %v1264
        %v1289 = vcombine.high %v1232, %v1264
        %v1290 = vcombine.low %v1239, %v1271
        %v1291 = vcombine.high %v1239, %v1271
        %v1292 = vcombine.low %v1248, %v1280
        %v1293 = vcombine.high %v1248, %v1280
        %v1294 = vcombine.low %v1255, %v1287
        %v1295 = vcombine.high %v1255, %v1287
        %v1296 = vcombine.low %v290, %v298
        %v1297 = vcombine.high %v290, %v298
        %v1299 = vunpack.c.l.s4 1983009808
        %v1300 = vunpack.c.0.s8 %v1299
        %v1301 = vlaneseq
        %v1302 = vshrl.u32 %v1301, 7
        %v1303 = vsub.s32 %v1300, %v1302
        %v1304 = vrot.slane %v1296, %v1303
        %v1306 = vunpack.c.l.s4 1983009808
        %v1307 = vunpack.c.0.s8 %v1306
        %v1308 = vlaneseq
        %v1309 = vshrl.u32 %v1308, 7
        %v1310 = vsub.s32 %v1307, %v1309
        %v1311 = vrot.slane %v1297, %v1310
        %v1312 = vcombine.low %v294, %v302
        %v1313 = vcombine.high %v294, %v302
        %v1315 = vunpack.c.l.s4 1983009808
        %v1316 = vunpack.c.0.s8 %v1315
        %v1317 = vlaneseq
        %v1318 = vshrl.u32 %v1317, 7
        %v1319 = vsub.s32 %v1316, %v1318
        %v1320 = vrot.slane %v1312, %v1319
        %v1322 = vunpack.c.l.s4 1983009808
        %v1323 = vunpack.c.0.s8 %v1322
        %v1324 = vlaneseq
        %v1325 = vshrl.u32 %v1324, 7
        %v1326 = vsub.s32 %v1323, %v1325
        %v1327 = vrot.slane %v1313, %v1326
        %v1328 = vcombine.low %v314, %v322
        %v1329 = vcombine.high %v314, %v322
        %v1331 = vunpack.c.l.s4 1983009808
        %v1332 = vunpack.c.0.s8 %v1331
        %v1333 = vlaneseq
        %v1334 = vshrl.u32 %v1333, 7
        %v1335 = vsub.s32 %v1332, %v1334
        %v1336 = vrot.slane %v1328, %v1335
        %v1338 = vunpack.c.l.s4 1983009808
        %v1339 = vunpack.c.0.s8 %v1338
        %v1340 = vlaneseq
        %v1341 = vshrl.u32 %v1340, 7
        %v1342 = vsub.s32 %v1339, %v1341
        %v1343 = vrot.slane %v1329, %v1342
        %v1344 = vcombine.low %v318, %v326
        %v1345 = vcombine.high %v318, %v326
        %v1347 = vunpack.c.l.s4 1983009808
        %v1348 = vunpack.c.0.s8 %v1347
        %v1349 = vlaneseq
        %v1350 = vshrl.u32 %v1349, 7
        %v1351 = vsub.s32 %v1348, %v1350
        %v1352 = vrot.slane %v1344, %v1351
        %v1354 = vunpack.c.l.s4 1983009808
        %v1355 = vunpack.c.0.s8 %v1354
        %v1356 = vlaneseq
        %v1357 = vshrl.u32 %v1356, 7
        %v1358 = vsub.s32 %v1355, %v1357
        %v1359 = vrot.slane %v1345, %v1358
        %v1360 = vcombine.low %v1304, %v1320
        %v1361 = vcombine.high %v1304, %v1320
        %v1363 = vunpack.c.l.s4 1934713408
        %v1364 = vunpack.c.0.s8 %v1363
        %v1365 = vlaneseq
        %v1366 = vshrl.u32 %v1365, 7
        %v1367 = vsub.s32 %v1364, %v1366
        %v1368 = vrot.slane %v1360, %v1367
        %v1370 = vunpack.c.l.s4 1934713408
        %v1371 = vunpack.c.0.s8 %v1370
        %v1372 = vlaneseq
        %v1373 = vshrl.u32 %v1372, 7
        %v1374 = vsub.s32 %v1371, %v1373
        %v1375 = vrot.slane %v1361, %v1374
        %v1376 = vcombine.low %v1311, %v1327
        %v1377 = vcombine.high %v1311, %v1327
        %v1379 = vunpack.c.l.s4 1934713408
        %v1380 = vunpack.c.0.s8 %v1379
        %v1381 = vlaneseq
        %v1382 = vshrl.u32 %v1381, 7
        %v1383 = vsub.s32 %v1380, %v1382
        %v1384 = vrot.slane %v1376, %v1383
        %v1386 = vunpack.c.l.s4 1934713408
        %v1387 = vunpack.c.0.s8 %v1386
        %v1388 = vlaneseq
        %v1389 = vshrl.u32 %v1388, 7
        %v1390 = vsub.s32 %v1387, %v1389
        %v1391 = vrot.slane %v1377, %v1390
        %v1392 = vcombine.low %v1336, %v1352
        %v1393 = vcombine.high %v1336, %v1352
        %v1395 = vunpack.c.l.s4 1934713408
        %v1396 = vunpack.c.0.s8 %v1395
        %v1397 = vlaneseq
        %v1398 = vshrl.u32 %v1397, 7
        %v1399 = vsub.s32 %v1396, %v1398
        %v1400 = vrot.slane %v1392, %v1399
        %v1402 = vunpack.c.l.s4 1934713408
        %v1403 = vunpack.c.0.s8 %v1402
        %v1404 = vlaneseq
        %v1405 = vshrl.u32 %v1404, 7
        %v1406 = vsub.s32 %v1403, %v1405
        %v1407 = vrot.slane %v1393, %v1406
        %v1408 = vcombine.low %v1343, %v1359
        %v1409 = vcombine.high %v1343, %v1359
        %v1411 = vunpack.c.l.s4 1934713408
        %v1412 = vunpack.c.0.s8 %v1411
        %v1413 = vlaneseq
        %v1414 = vshrl.u32 %v1413, 7
        %v1415 = vsub.s32 %v1412, %v1414
        %v1416 = vrot.slane %v1408, %v1415
        %v1418 = vunpack.c.l.s4 1934713408
        %v1419 = vunpack.c.0.s8 %v1418
        %v1420 = vlaneseq
        %v1421 = vshrl.u32 %v1420, 7
        %v1422 = vsub.s32 %v1419, %v1421
        %v1423 = vrot.slane %v1409, %v1422
        %v1424 = vcombine.low %v1368, %v1400
        %v1425 = vcombine.high %v1368, %v1400
        %v1426 = vcombine.low %v1375, %v1407
        %v1427 = vcombine.high %v1375, %v1407
        %v1428 = vcombine.low %v1384, %v1416
        %v1429 = vcombine.high %v1384, %v1416
        %v1430 = vcombine.low %v1391, %v1423
        %v1431 = vcombine.high %v1391, %v1423
        %v1432 = vcombine.low %v340, %v350
        %v1433 = vcombine.high %v340, %v350
        %v1435 = vunpack.c.l.s4 1983009808
        %v1436 = vunpack.c.0.s8 %v1435
        %v1437 = vlaneseq
        %v1438 = vshrl.u32 %v1437, 7
        %v1439 = vsub.s32 %v1436, %v1438
        %v1440 = vrot.slane %v1432, %v1439
        %v1442 = vunpack.c.l.s4 1983009808
        %v1443 = vunpack.c.0.s8 %v1442
        %v1444 = vlaneseq
        %v1445 = vshrl.u32 %v1444, 7
        %v1446 = vsub.s32 %v1443, %v1445
        %v1447 = vrot.slane %v1433, %v1446
        %v1448 = vcombine.low %v345, %v355
        %v1449 = vcombine.high %v345, %v355
        %v1451 = vunpack.c.l.s4 1983009808
        %v1452 = vunpack.c.0.s8 %v1451
        %v1453 = vlaneseq
        %v1454 = vshrl.u32 %v1453, 7
        %v1455 = vsub.s32 %v1452, %v1454
        %v1456 = vrot.slane %v1448, %v1455
        %v1458 = vunpack.c.l.s4 1983009808
        %v1459 = vunpack.c.0.s8 %v1458
        %v1460 = vlaneseq
        %v1461 = vshrl.u32 %v1460, 7
        %v1462 = vsub.s32 %v1459, %v1461
        %v1463 = vrot.slane %v1449, %v1462
        %v1464 = vcombine.low %v367, %v375
        %v1465 = vcombine.high %v367, %v375
        %v1467 = vunpack.c.l.s4 1983009808
        %v1468 = vunpack.c.0.s8 %v1467
        %v1469 = vlaneseq
        %v1470 = vshrl.u32 %v1469, 7
        %v1471 = vsub.s32 %v1468, %v1470
        %v1472 = vrot.slane %v1464, %v1471
        %v1474 = vunpack.c.l.s4 1983009808
        %v1475 = vunpack.c.0.s8 %v1474
        %v1476 = vlaneseq
        %v1477 = vshrl.u32 %v1476, 7
        %v1478 = vsub.s32 %v1475, %v1477
        %v1479 = vrot.slane %v1465, %v1478
        %v1480 = vcombine.low %v371, %v379
        %v1481 = vcombine.high %v371, %v379
        %v1483 = vunpack.c.l.s4 1983009808
        %v1484 = vunpack.c.0.s8 %v1483
        %v1485 = vlaneseq
        %v1486 = vshrl.u32 %v1485, 7
        %v1487 = vsub.s32 %v1484, %v1486
        %v1488 = vrot.slane %v1480, %v1487
        %v1490 = vunpack.c.l.s4 1983009808
        %v1491 = vunpack.c.0.s8 %v1490
        %v1492 = vlaneseq
        %v1493 = vshrl.u32 %v1492, 7
        %v1494 = vsub.s32 %v1491, %v1493
        %v1495 = vrot.slane %v1481, %v1494
        %v1496 = vcombine.low %v1440, %v1456
        %v1497 = vcombine.high %v1440, %v1456
        %v1499 = vunpack.c.l.s4 1934713408
        %v1500 = vunpack.c.0.s8 %v1499
        %v1501 = vlaneseq
        %v1502 = vshrl.u32 %v1501, 7
        %v1503 = vsub.s32 %v1500, %v1502
        %v1504 = vrot.slane %v1496, %v1503
        %v1506 = vunpack.c.l.s4 1934713408
        %v1507 = vunpack.c.0.s8 %v1506
        %v1508 = vlaneseq
        %v1509 = vshrl.u32 %v1508, 7
        %v1510 = vsub.s32 %v1507, %v1509
        %v1511 = vrot.slane %v1497, %v1510
        %v1512 = vcombine.low %v1447, %v1463
        %v1513 = vcombine.high %v1447, %v1463
        %v1515 = vunpack.c.l.s4 1934713408
        %v1516 = vunpack.c.0.s8 %v1515
        %v1517 = vlaneseq
        %v1518 = vshrl.u32 %v1517, 7
        %v1519 = vsub.s32 %v1516, %v1518
        %v1520 = vrot.slane %v1512, %v1519
        %v1522 = vunpack.c.l.s4 1934713408
        %v1523 = vunpack.c.0.s8 %v1522
        %v1524 = vlaneseq
        %v1525 = vshrl.u32 %v1524, 7
        %v1526 = vsub.s32 %v1523, %v1525
        %v1527 = vrot.slane %v1513, %v1526
        %v1528 = vcombine.low %v1472, %v1488
        %v1529 = vcombine.high %v1472, %v1488
        %v1531 = vunpack.c.l.s4 1934713408
        %v1532 = vunpack.c.0.s8 %v1531
        %v1533 = vlaneseq
        %v1534 = vshrl.u32 %v1533, 7
        %v1535 = vsub.s32 %v1532, %v1534
        %v1536 = vrot.slane %v1528, %v1535
        %v1538 = vunpack.c.l.s4 1934713408
        %v1539 = vunpack.c.0.s8 %v1538
        %v1540 = vlaneseq
        %v1541 = vshrl.u32 %v1540, 7
        %v1542 = vsub.s32 %v1539, %v1541
        %v1543 = vrot.slane %v1529, %v1542
        %v1544 = vcombine.low %v1479, %v1495
        %v1545 = vcombine.high %v1479, %v1495
        %v1547 = vunpack.c.l.s4 1934713408
        %v1548 = vunpack.c.0.s8 %v1547
        %v1549 = vlaneseq
        %v1550 = vshrl.u32 %v1549, 7
        %v1551 = vsub.s32 %v1548, %v1550
        %v1552 = vrot.slane %v1544, %v1551
        %v1554 = vunpack.c.l.s4 1934713408
        %v1555 = vunpack.c.0.s8 %v1554
        %v1556 = vlaneseq
        %v1557 = vshrl.u32 %v1556, 7
        %v1558 = vsub.s32 %v1555, %v1557
        %v1559 = vrot.slane %v1545, %v1558
        %v1560 = vcombine.low %v1504, %v1536
        %v1561 = vcombine.high %v1504, %v1536
        %v1562 = vcombine.low %v1511, %v1543
        %v1563 = vcombine.high %v1511, %v1543
        %v1564 = vcombine.low %v1520, %v1552
        %v1565 = vcombine.high %v1520, %v1552
        %v1566 = vcombine.low %v1527, %v1559
        %v1567 = vcombine.high %v1527, %v1559
        %v1568 = vcombine.low %v391, %v399
        %v1569 = vcombine.high %v391, %v399
        %v1571 = vunpack.c.l.s4 1983009808
        %v1572 = vunpack.c.0.s8 %v1571
        %v1573 = vlaneseq
        %v1574 = vshrl.u32 %v1573, 7
        %v1575 = vsub.s32 %v1572, %v1574
        %v1576 = vrot.slane %v1568, %v1575
        %v1578 = vunpack.c.l.s4 1983009808
        %v1579 = vunpack.c.0.s8 %v1578
        %v1580 = vlaneseq
        %v1581 = vshrl.u32 %v1580, 7
        %v1582 = vsub.s32 %v1579, %v1581
        %v1583 = vrot.slane %v1569, %v1582
        %v1584 = vcombine.low %v395, %v403
        %v1585 = vcombine.high %v395, %v403
        %v1587 = vunpack.c.l.s4 1983009808
        %v1588 = vunpack.c.0.s8 %v1587
        %v1589 = vlaneseq
        %v1590 = vshrl.u32 %v1589, 7
        %v1591 = vsub.s32 %v1588, %v1590
        %v1592 = vrot.slane %v1584, %v1591
        %v1594 = vunpack.c.l.s4 1983009808
        %v1595 = vunpack.c.0.s8 %v1594
        %v1596 = vlaneseq
        %v1597 = vshrl.u32 %v1596, 7
        %v1598 = vsub.s32 %v1595, %v1597
        %v1599 = vrot.slane %v1585, %v1598
        %v1600 = vcombine.low %v1576, %v1592
        %v1601 = vcombine.high %v1576, %v1592
        %v1603 = vunpack.c.l.s4 1934713408
        %v1604 = vunpack.c.0.s8 %v1603
        %v1605 = vlaneseq
        %v1606 = vshrl.u32 %v1605, 7
        %v1607 = vsub.s32 %v1604, %v1606
        %v1608 = vrot.slane %v1600, %v1607
        %v1610 = vunpack.c.l.s4 1934713408
        %v1611 = vunpack.c.0.s8 %v1610
        %v1612 = vlaneseq
        %v1613 = vshrl.u32 %v1612, 7
        %v1614 = vsub.s32 %v1611, %v1613
        %v1615 = vrot.slane %v1601, %v1614
        %v1616 = vcombine.low %v1583, %v1599
        %v1617 = vcombine.high %v1583, %v1599
        %v1619 = vunpack.c.l.s4 1934713408
        %v1620 = vunpack.c.0.s8 %v1619
        %v1621 = vlaneseq
        %v1622 = vshrl.u32 %v1621, 7
        %v1623 = vsub.s32 %v1620, %v1622
        %v1624 = vrot.slane %v1616, %v1623
        %v1626 = vunpack.c.l.s4 1934713408
        %v1627 = vunpack.c.0.s8 %v1626
        %v1628 = vlaneseq
        %v1629 = vshrl.u32 %v1628, 7
        %v1630 = vsub.s32 %v1627, %v1629
        %v1631 = vrot.slane %v1617, %v1630
        %v1632 = vcombine.high %v1608, 0.0
        %v1633 = vcombine.high %v1615, 0.0
        %v1634 = vcombine.high %v1624, 0.0
        %v1635 = vcombine.high %v1631, 0.0
        %1641 = vrot.lane.b32.xlu0 %v541, 16
        %v1642 = vpop.permute.xlu0 %1641
        %1643 = vrot.lane.b32.xlu0 %v677, 16
        %v1644 = vpop.permute.xlu0 %1643
        %1645 = vrot.lane.b32.xlu0 %v813, 16
        %v1646 = vpop.permute.xlu0 %1645
        %1647 = vrot.lane.b32.xlu0 %v949, 16
        %v1648 = vpop.permute.xlu0 %1647
        %1649 = vrot.lane.b32.xlu0 %v1020, 16
        %v1650 = vpop.permute.xlu0 %1649
        %1661 = vrot.lane.b32.xlu0 %v542, 32
        %v1662 = vpop.permute.xlu0 %1661
        %1663 = vrot.lane.b32.xlu0 %v678, 32
        %v1664 = vpop.permute.xlu0 %1663
        %1665 = vrot.lane.b32.xlu0 %v814, 32
        %v1666 = vpop.permute.xlu0 %1665
        %1667 = vrot.lane.b32.xlu0 %v950, 32
        %v1668 = vpop.permute.xlu0 %1667
        %1669 = vrot.lane.b32.xlu0 %v1003, 32
        %v1670 = vpop.permute.xlu0 %1669
        %1681 = vrot.lane.b32.xlu0 %v543, 48
        %v1682 = vpop.permute.xlu0 %1681
        %1683 = vrot.lane.b32.xlu0 %v679, 48
        %v1684 = vpop.permute.xlu0 %1683
        %1685 = vrot.lane.b32.xlu0 %v815, 48
        %v1686 = vpop.permute.xlu0 %1685
        %1687 = vrot.lane.b32.xlu0 %v951, 48
        %v1688 = vpop.permute.xlu0 %1687
        %1689 = vrot.lane.b32.xlu0 %v1021, 48
        %v1690 = vpop.permute.xlu0 %1689
        %1701 = vrot.lane.b32.xlu0 %v544, 64
        %v1702 = vpop.permute.xlu0 %1701
        %1703 = vrot.lane.b32.xlu0 %v680, 64
        %v1704 = vpop.permute.xlu0 %1703
        %1705 = vrot.lane.b32.xlu0 %v816, 64
        %v1706 = vpop.permute.xlu0 %1705
        %1707 = vrot.lane.b32.xlu0 %v952, 64
        %v1708 = vpop.permute.xlu0 %1707
        %1709 = vrot.lane.b32.xlu0 %v1012, 64
        %v1710 = vpop.permute.xlu0 %1709
        %1721 = vrot.lane.b32.xlu0 %v545, 80
        %v1722 = vpop.permute.xlu0 %1721
        %1723 = vrot.lane.b32.xlu0 %v681, 80
        %v1724 = vpop.permute.xlu0 %1723
        %1725 = vrot.lane.b32.xlu0 %v817, 80
        %v1726 = vpop.permute.xlu0 %1725
        %1727 = vrot.lane.b32.xlu0 %v953, 80
        %v1728 = vpop.permute.xlu0 %1727
        %1729 = vrot.lane.b32.xlu0 %v1022, 80
        %v1730 = vpop.permute.xlu0 %1729
        %1741 = vrot.lane.b32.xlu0 %v546, 96
        %v1742 = vpop.permute.xlu0 %1741
        %1743 = vrot.lane.b32.xlu0 %v682, 96
        %v1744 = vpop.permute.xlu0 %1743
        %1745 = vrot.lane.b32.xlu0 %v818, 96
        %v1746 = vpop.permute.xlu0 %1745
        %1747 = vrot.lane.b32.xlu0 %v954, 96
        %v1748 = vpop.permute.xlu0 %1747
        %1749 = vrot.lane.b32.xlu0 %v1019, 96
        %v1750 = vpop.permute.xlu0 %1749
        %1761 = vrot.lane.b32.xlu0 %v547, 112
        %v1762 = vpop.permute.xlu0 %1761
        %1763 = vrot.lane.b32.xlu0 %v683, 112
        %v1764 = vpop.permute.xlu0 %1763
        %1765 = vrot.lane.b32.xlu0 %v819, 112
        %v1766 = vpop.permute.xlu0 %1765
        %1767 = vrot.lane.b32.xlu0 %v955, 112
        %v1768 = vpop.permute.xlu0 %1767
        %1769 = vrot.lane.b32.xlu0 %v1023, 112
        %v1770 = vpop.permute.xlu0 %1769
        %1781 = vrot.lane.b32.xlu0 %v1153, 16
        %v1782 = vpop.permute.xlu0 %1781
        %1783 = vrot.lane.b32.xlu0 %v1289, 16
        %v1784 = vpop.permute.xlu0 %1783
        %1785 = vrot.lane.b32.xlu0 %v1425, 16
        %v1786 = vpop.permute.xlu0 %1785
        %1787 = vrot.lane.b32.xlu0 %v1561, 16
        %v1788 = vpop.permute.xlu0 %1787
        %1789 = vrot.lane.b32.xlu0 %v1632, 16
        %v1790 = vpop.permute.xlu0 %1789
        %1801 = vrot.lane.b32.xlu0 %v1154, 32
        %v1802 = vpop.permute.xlu0 %1801
        %1803 = vrot.lane.b32.xlu0 %v1290, 32
        %v1804 = vpop.permute.xlu0 %1803
        %1805 = vrot.lane.b32.xlu0 %v1426, 32
        %v1806 = vpop.permute.xlu0 %1805
        %1807 = vrot.lane.b32.xlu0 %v1562, 32
        %v1808 = vpop.permute.xlu0 %1807
        %1809 = vrot.lane.b32.xlu0 %v1615, 32
        %v1810 = vpop.permute.xlu0 %1809
        %1821 = vrot.lane.b32.xlu0 %v1155, 48
        %v1822 = vpop.permute.xlu0 %1821
        %1823 = vrot.lane.b32.xlu0 %v1291, 48
        %v1824 = vpop.permute.xlu0 %1823
        %1825 = vrot.lane.b32.xlu0 %v1427, 48
        %v1826 = vpop.permute.xlu0 %1825
        %1827 = vrot.lane.b32.xlu0 %v1563, 48
        %v1828 = vpop.permute.xlu0 %1827
        %1829 = vrot.lane.b32.xlu0 %v1633, 48
        %v1830 = vpop.permute.xlu0 %1829
        %1841 = vrot.lane.b32.xlu0 %v1156, 64
        %v1842 = vpop.permute.xlu0 %1841
        %1843 = vrot.lane.b32.xlu0 %v1292, 64
        %v1844 = vpop.permute.xlu0 %1843
        %1845 = vrot.lane.b32.xlu0 %v1428, 64
        %v1846 = vpop.permute.xlu0 %1845
        %1847 = vrot.lane.b32.xlu0 %v1564, 64
        %v1848 = vpop.permute.xlu0 %1847
        %1849 = vrot.lane.b32.xlu0 %v1624, 64
        %v1850 = vpop.permute.xlu0 %1849
        %1861 = vrot.lane.b32.xlu0 %v1157, 80
        %v1862 = vpop.permute.xlu0 %1861
        %1863 = vrot.lane.b32.xlu0 %v1293, 80
        %v1864 = vpop.permute.xlu0 %1863
        %1865 = vrot.lane.b32.xlu0 %v1429, 80
        %v1866 = vpop.permute.xlu0 %1865
        %1867 = vrot.lane.b32.xlu0 %v1565, 80
        %v1868 = vpop.permute.xlu0 %1867
        %1869 = vrot.lane.b32.xlu0 %v1634, 80
        %v1870 = vpop.permute.xlu0 %1869
        %1881 = vrot.lane.b32.xlu0 %v1158, 96
        %v1882 = vpop.permute.xlu0 %1881
        %1883 = vrot.lane.b32.xlu0 %v1294, 96
        %v1884 = vpop.permute.xlu0 %1883
        %1885 = vrot.lane.b32.xlu0 %v1430, 96
        %v1886 = vpop.permute.xlu0 %1885
        %1887 = vrot.lane.b32.xlu0 %v1566, 96
        %v1888 = vpop.permute.xlu0 %1887
        %1889 = vrot.lane.b32.xlu0 %v1631, 96
        %v1890 = vpop.permute.xlu0 %1889
        %1901 = vrot.lane.b32.xlu0 %v1159, 112
        %v1902 = vpop.permute.xlu0 %1901
        %1903 = vrot.lane.b32.xlu0 %v1295, 112
        %v1904 = vpop.permute.xlu0 %1903
        %1905 = vrot.lane.b32.xlu0 %v1431, 112
        %v1906 = vpop.permute.xlu0 %1905
        %1907 = vrot.lane.b32.xlu0 %v1567, 112
        %v1908 = vpop.permute.xlu0 %1907
        %1909 = vrot.lane.b32.xlu0 %v1635, 112
        %v1910 = vpop.permute.xlu0 %1909
        %vm1916 = vcmask 130048
        %v1917 = vsel %vm1916, %v540, %v1642
        %v1918 = vsel %vm1916, %v676, %v1644
        %v1919 = vsel %vm1916, %v812, %v1646
        %v1920 = vsel %vm1916, %v948, %v1648
        %v1921 = vsel %vm1916, %v996, %v1650
        %vm1922 = vcmask 261120
        %v1923 = vsel %vm1922, %v1917, %v1662
        %v1924 = vsel %vm1922, %v1918, %v1664
        %v1925 = vsel %vm1922, %v1919, %v1666
        %v1926 = vsel %vm1922, %v1920, %v1668
        %v1927 = vsel %vm1922, %v1921, %v1670
        %vm1928 = vcmask 392192
        %v1929 = vsel %vm1928, %v1923, %v1682
        %v1930 = vsel %vm1928, %v1924, %v1684
        %v1931 = vsel %vm1928, %v1925, %v1686
        %v1932 = vsel %vm1928, %v1926, %v1688
        %v1933 = vsel %vm1928, %v1927, %v1690
        %vm1934 = vcmask 523264
        %v1935 = vsel %vm1934, %v1929, %v1702
        %v1936 = vsel %vm1934, %v1930, %v1704
        %v1937 = vsel %vm1934, %v1931, %v1706
        %v1938 = vsel %vm1934, %v1932, %v1708
        %v1939 = vsel %vm1934, %v1933, %v1710
        %vm1940 = vcmask 654336
        %v1941 = vsel %vm1940, %v1935, %v1722
        %v1942 = vsel %vm1940, %v1936, %v1724
        %v1943 = vsel %vm1940, %v1937, %v1726
        %v1944 = vsel %vm1940, %v1938, %v1728
        %v1945 = vsel %vm1940, %v1939, %v1730
        %vm1946 = vcmask 785408
        %v1947 = vsel %vm1946, %v1941, %v1742
        %v1948 = vsel %vm1946, %v1942, %v1744
        %v1949 = vsel %vm1946, %v1943, %v1746
        %v1950 = vsel %vm1946, %v1944, %v1748
        %v1951 = vsel %vm1946, %v1945, %v1750
        %vm1952 = vcmask 916480
        %v1953 = vsel %vm1952, %v1947, %v1762
        %v1954 = vsel %vm1952, %v1948, %v1764
        %v1955 = vsel %vm1952, %v1949, %v1766
        %v1956 = vsel %vm1952, %v1950, %v1768
        %v1957 = vsel %vm1952, %v1951, %v1770
        %v1958 = vsel %vm1916, %v1152, %v1782
        %v1959 = vsel %vm1916, %v1288, %v1784
        %v1960 = vsel %vm1916, %v1424, %v1786
        %v1961 = vsel %vm1916, %v1560, %v1788
        %v1962 = vsel %vm1916, %v1608, %v1790
        %v1963 = vsel %vm1922, %v1958, %v1802
        %v1964 = vsel %vm1922, %v1959, %v1804
        %v1965 = vsel %vm1922, %v1960, %v1806
        %v1966 = vsel %vm1922, %v1961, %v1808
        %v1967 = vsel %vm1922, %v1962, %v1810
        %v1968 = vsel %vm1928, %v1963, %v1822
        %v1969 = vsel %vm1928, %v1964, %v1824
        %v1970 = vsel %vm1928, %v1965, %v1826
        %v1971 = vsel %vm1928, %v1966, %v1828
        %v1972 = vsel %vm1928, %v1967, %v1830
        %v1973 = vsel %vm1934, %v1968, %v1842
        %v1974 = vsel %vm1934, %v1969, %v1844
        %v1975 = vsel %vm1934, %v1970, %v1846
        %v1976 = vsel %vm1934, %v1971, %v1848
        %v1977 = vsel %vm1934, %v1972, %v1850
        %v1978 = vsel %vm1940, %v1973, %v1862
        %v1979 = vsel %vm1940, %v1974, %v1864
        %v1980 = vsel %vm1940, %v1975, %v1866
        %v1981 = vsel %vm1940, %v1976, %v1868
        %v1982 = vsel %vm1940, %v1977, %v1870
        %v1983 = vsel %vm1946, %v1978, %v1882
        %v1984 = vsel %vm1946, %v1979, %v1884
        %v1985 = vsel %vm1946, %v1980, %v1886
        %v1986 = vsel %vm1946, %v1981, %v1888
        %v1987 = vsel %vm1946, %v1982, %v1890
        %v1988 = vsel %vm1952, %v1983, %v1902
        %v1989 = vsel %vm1952, %v1984, %v1904
        %v1990 = vsel %vm1952, %v1985, %v1906
        %v1991 = vsel %vm1952, %v1986, %v1908
        %v1992 = vsel %vm1952, %v1987, %v1910
        %v1993 = vld [vmem:[%s1] sm:$0xff]
        %v1994 = vld [vmem:[%s2] sm:$0xff]
        %1996 = vset.pattern.permute.xlu0 0
        %1997 = vperm.xlu0 %1996, %v1994
        %v1998 = vpop.permute.xlu0 %1997
        %vm2000 = vcmask 293888
        %v2002 = vsel %vm2000, %v1993, 0
        %vm2004 = vcmask 1043456
        %v2006 = vsel %vm2004, %v1957, 0
        %v2009 = vsel %vm2004, %v1992, 0
        %2011 = vmatprep.subr.mxu0 %v1988
        %2012 = vmatpush1.msra.mxu0 %v1953
        %2013 = vmatprep.subr.mxu0 %v1989
        %2014 = vmatpush1.msra.mxu0 %v1954
        %2015 = vmatprep.subr.mxu0 %v1990
        %2016 = vmatpush1.msra.mxu0 %v1955
        %2017 = vmatprep.subr.mxu0 %v1991
        %2018 = vmatpush1.msra.mxu0 %v1956
        %2019 = vmatprep.subr.mxu0 %v2009
        %2020 = vmatpush1.msra.mxu0 %v2006
        %2021 = vmatprep.subr.mxu0 0.0
        %2022 = vmatpush1.msra.mxu0 0.0
        %2023 = vmatprep.subr.mxu0 0.0
        %2024 = vmatpush1.msra.mxu0 0.0
        %2025 = vmatprep.subr.mxu0 0.0
        %2026 = vmatpush1.msra.mxu0 0.0
        %2027 = vmatprep.subr.mxu0 0.0
        %2028 = vmatpush1.msra.mxu0 0.0
        %2029 = vmatprep.subr.mxu0 0.0
        %2030 = vmatpush1.msra.mxu0 0.0
        %2031 = vmatprep.subr.mxu0 0.0
        %2032 = vmatpush1.msra.mxu0 0.0
        %2033 = vmatprep.subr.mxu0 0.0
        %2034 = vmatpush1.msra.mxu0 0.0
        %2035 = vmatprep.subr.mxu0 0.0
        %2036 = vmatpush1.msra.mxu0 0.0
        %2037 = vmatprep.subr.mxu0 0.0
        %2038 = vmatpush1.msra.mxu0 0.0
        %2039 = vmatprep.subr.mxu0 0.0
        %2040 = vmatpush1.msra.mxu0 0.0
        %2041 = vmatprep.subr.mxu0 0.0
        %2042 = vmatpush1.msra.mxu0 0.0
        %2043 = vmatprep.subr.mxu0 0.0
        %2044 = vmatpush1.msra.mxu0 0.0
        %2045 = vmatprep.subr.mxu0 0.0
        %2046 = vmatpush1.msra.mxu0 0.0
        %2047 = vmatprep.subr.mxu0 0.0
        %2048 = vmatpush1.msra.mxu0 0.0
        %2049 = vmatprep.subr.mxu0 0.0
        %2050 = vmatpush1.msra.mxu0 0.0
        %2051 = vmatprep.subr.mxu0 0.0
        %2052 = vmatpush1.msra.mxu0 0.0
        %2053 = vmatprep.subr.mxu0 0.0
        %2054 = vmatpush1.msra.mxu0 0.0
        %2055 = vmatprep.subr.mxu0 0.0
        %2056 = vmatpush1.msra.mxu0 0.0
        %2057 = vmatprep.subr.mxu0 0.0
        %2058 = vmatpush1.msra.mxu0 0.0
        %2059 = vmatprep.subr.mxu0 0.0
        %2060 = vmatpush1.msra.mxu0 0.0
        %2061 = vmatprep.subr.mxu0 0.0
        %2062 = vmatpush1.msra.mxu0 0.0
        %2063 = vmatprep.subr.mxu0 0.0
        %2064 = vmatpush1.msra.mxu0 0.0
        %2065 = vmatprep.subr.mxu0 0.0
        %2066 = vmatpush1.msra.mxu0 0.0
        %2067 = vmatprep.subr.mxu0 0.0
        %2068 = vmatpush1.msra.mxu0 0.0
        %2069 = vmatprep.subr.mxu0 0.0
        %2070 = vmatpush1.msra.mxu0 0.0
        %2071 = vmatprep.subr.mxu0 0.0
        %2072 = vmatpush1.msra.mxu0 0.0
        %2073 = vmatprep.subr.mxu0 0.0
        %2074 = vmatpush1.msra.mxu0 0.0
        %2075 = vmatprep.mubr.f32.mxu0 0.0
        %2076 = vmatmul.mubr.f32.gmra.mrb[0].mxu0 %v2002
        %v2077 = vpop.f32.mrb[0].mxu0
        %v2078 = vadd.f32 %v1998, %v2077
        %v2079 = vpop.f32.mrb[0].mxu0
        %v2080 = vadd.f32 %v1998, %v2079
        %2081 = vdwg.mxu0
        %2082 = vst [vmem:[%s177] sm:$0xff] %v2078
        %2083 = vst [vmem:[%s177 + $0x8] sm:$0xff] %v2080
        %s2084 = sand.u32 %s107, 1
        %s2085 = scalar_lea.sflag [#allocation3], %s2084
        %s2086 = sand.u32 %s107, 1
        %s2087 = smul.addr %s2086, 16
        %s2088 = scalar_lea.vmem [#allocation2], %s2087
        // Predicated region
        $region33: #{tpu_custom_call.1} parent=31 // pred_check
          %p2089 = pneg %p117
        $region34: #{tpu_custom_call.1} parent=31 // pred_check_branch
          %2091 = sbr.rel (%p2089) target = $region36
        $region35: #{tpu_custom_call.1} parent=31 // pred_region
          %s2092 = smul.u32 2, %s22
          %s2094 = ssub.s32 256, 256
          %2095 = vsyncadd %s2085, %s2094
          %s2096 = smul.addr %s21, 2
          %s2097 = sadd.s32 %s2092, %s2096
          %s2098 = smul.addr %s2097, 128
          %s2099 = scalar_lea.hbm %s3, %s2098
          %s2101 = sshll.u32 %s2088, 4
          %s2102 = int_to_ptr.vmem [resolvable:$true] %s2101
          %2104 = dma.vmem_to_hbm [thread:$0]  %s2102, 256, %s2099, %s2085
        $region36: #{tpu_custom_call.1} parent=31 // pred_fallthru
          _
      $region32: #{tpu_custom_call.1} parent=5 // pred_fallthru
        _
      %p2105 = scmp.le.s32.totalorder 2, %s12
      // Predicated region
      $region37: #{tpu_custom_call.1} parent=5 // pred_check
        %p2106 = pneg %p2105
      $region38: #{tpu_custom_call.1} parent=5 // pred_check_branch
        %2108 = sbr.rel (%p2106) target = $region40
      $region39: #{tpu_custom_call.1} parent=5 // pred_region
        %s2109 = ssub.s32 %s12, 2
        // Predicated region
        $region41: #{tpu_custom_call.1} parent=39 // pred_check
          %p2110 = pneg %p123
        $region42: #{tpu_custom_call.1} parent=39 // pred_check_branch
          %2112 = sbr.rel (%p2110) target = $region44
        $region43: #{tpu_custom_call.1} parent=39 // pred_region
          %s2113 = sand.u32 %s108, 1
          %s2114 = scalar_lea.sflag [#allocation3], %s2113
          %s2115 = sand.u32 %s108, 1
          %s2116 = smul.addr %s2115, 16
          %s2117 = scalar_lea.vmem [#allocation2], %s2116
          %2118 = dma.done %s2114, 256
        $region44: #{tpu_custom_call.1} parent=39 // pred_fallthru
          _
      $region40: #{tpu_custom_call.1} parent=5 // pred_fallthru
        _
    $region6: #{tpu_custom_call.1} parent=1 // loop_footer
      %s16 = sadd.s32 1, %s12
    $region7: #{tpu_custom_call.1} parent=1 // loop_footer_branch
      %11 = sbr.rel target = $region3
    $region8: #{tpu_custom_call.1} parent=1 // loop_exit
      _
    %2119 = vsyncpa [#allocation3], 1
    %s2120 = scalar_lea.sflag [#allocation3], 1
    %2121 = vsyncpa %s2120, 1

</llo_original>
